<compile_context>
chip_gen: v5e
topology: v5e:2x2
jax: 0.10.0
libtpu: 0.0.40
codegen_flags: <defaults>
</compile_context>

<pallas_src>
import jax
import jax.numpy as jnp
from jax.experimental import pallas as pl
from jax.experimental.pallas import tpu as pltpu

# ----------------- small synthetic config (consistent with the module) -------
BATCH       = 2
PREFIX_LEN  = 2            # prefix_length
PREFIX_SIZE = 64           # prefix_size (CLIP feature dim, small stand-in)
EMBED       = 32           # gpt_embedding_size (small stand-in)
SEQ         = 16           # token sequence length
VOCAB       = 128          # vocab size of the embedding table (stand-in)
Q_LEN       = 4            # question length (prefix insertion offset)

# MLP sizes per module: (prefix_size, E*P//2, E*P, E*P)
H1 = EMBED * PREFIX_LEN // 2   # 32
H2 = EMBED * PREFIX_LEN        # 64

ROWS  = BATCH * SEQ            # flattened (batch, seq) rows
E_PAD = 128                    # lane-dense padded embedding width (multiple of 128)
TILE_R = 16                    # output rows per grid step (multiple of 8, divides ROWS)
assert ROWS % TILE_R == 0
GRID = ROWS // TILE_R


# ----------------- fused kernel: DMA wte gather + MLP + prefix insertion -----
def fused_forward_kernel(q_ref, tok_ref,                      # scalar-prefetch (SMEM)
                         prefix_ref, wte_hbm,                 # VMEM / HBM(ANY)
                         w1_ref, b1_ref, w2_ref, b2_ref, w3_ref, b3_ref,
                         out_ref, gather_sem):
    f32 = jnp.float32
    row0 = pl.program_id(0) * TILE_R

    # ---- 1. wte gather: one HBM->VMEM row DMA per output row of this tile ----
    # Token IDs are SMEM scalars (scalar prefetch); start all DMAs, wait later so
    # they overlap with the MLP matmuls below.
    for r in range(TILE_R):
        tok = tok_ref[row0 + r]
        pltpu.make_async_copy(wte_hbm.at[pl.ds(tok, 1)],
                              out_ref.at[pl.ds(r, 1)],
                              gather_sem.at[r]).start()

    # ---- 2. clip_project MLP (Dropout(p=0.5) -> identity at inference) ----
    x = prefix_ref[...]                                               # (B, PREFIX_SIZE)
    h = jnp.tanh(jnp.dot(x, w1_ref[...], preferred_element_type=f32) + b1_ref[...])
    h = jnp.tanh(jnp.dot(h, w2_ref[...], preferred_element_type=f32) + b2_ref[...])
    # Single fused final Linear: (B, PREFIX_LEN * E_PAD). Each prefix row is a
    # static, 128-aligned lane sub-slice — no second MXU pass, no relayout.
    proj = jnp.dot(h, w3_ref[...], preferred_element_type=f32) + b3_ref[...]

    # ---- wait for all gather DMAs before overwriting prefix rows -------------
    for r in range(TILE_R):
        pltpu.make_async_copy(wte_hbm.at[pl.ds(0, 1)],
                              out_ref.at[pl.ds(r, 1)],
                              gather_sem.at[r]).wait()

    # ---- 3. prefix insertion: PREFIX_LEN*BATCH direct dynamic row stores -----
    q = q_ref[0]                                                      # SMEM scalar
    for b in range(BATCH):
        for j in range(PREFIX_LEN):
            gr = b * SEQ + q + j          # global output row (dynamic via q)

            @pl.when((gr >= row0) & (gr < row0 + TILE_R))
            def _(b=b, j=j, gr=gr):
                out_ref[pl.ds(gr - row0, 1), :] = (
                    proj[b:b + 1, j * E_PAD:(j + 1) * E_PAD])


# ----------------- full forward (glue in plain JAX) ---------------------------
def vqamed_forward(prefix, tokens, mask, q_len, params):
    del mask  # only consumed by the (un-translated) GPT call
    if isinstance(q_len, int):
        assert q_len + PREFIX_LEN <= SEQ, "prefix insertion must fit in the sequence"

    # ---- host-side (one-time) layout prep: lane-dense padding to E_PAD ------
    wte_pad = jnp.zeros((VOCAB, E_PAD), jnp.float32).at[:, :EMBED].set(params["wte"])
    w3_pad = (jnp.zeros((H2, PREFIX_LEN, E_PAD), jnp.float32)
              .at[:, :, :EMBED].set(params["w3"].reshape(H2, PREFIX_LEN, EMBED))
              .reshape(H2, PREFIX_LEN * E_PAD))
    b3_pad = (jnp.zeros((1, PREFIX_LEN, E_PAD), jnp.float32)
              .at[:, :, :EMBED].set(params["b3"].reshape(1, PREFIX_LEN, EMBED))
              .reshape(1, PREFIX_LEN * E_PAD))

    tok_flat = tokens.reshape(ROWS).astype(jnp.int32)
    q_arr = jnp.asarray([q_len], dtype=jnp.int32)

    grid_spec = pltpu.PrefetchScalarGridSpec(
        num_scalar_prefetch=2,               # q_len, token ids -> SMEM
        grid=(GRID,),
        in_specs=[
            pl.BlockSpec((BATCH, PREFIX_SIZE), lambda t, q, tok: (0, 0)),      # prefix
            pl.BlockSpec(memory_space=pl.ANY),                                 # wte (HBM)
            pl.BlockSpec((PREFIX_SIZE, H1), lambda t, q, tok: (0, 0)),         # w1
            pl.BlockSpec((1, H1), lambda t, q, tok: (0, 0)),                   # b1
            pl.BlockSpec((H1, H2), lambda t, q, tok: (0, 0)),                  # w2
            pl.BlockSpec((1, H2), lambda t, q, tok: (0, 0)),                   # b2
            pl.BlockSpec((H2, PREFIX_LEN * E_PAD), lambda t, q, tok: (0, 0)),  # w3
            pl.BlockSpec((1, PREFIX_LEN * E_PAD), lambda t, q, tok: (0, 0)),   # b3
        ],
        out_specs=pl.BlockSpec((TILE_R, E_PAD), lambda t, q, tok: (t, 0)),
        scratch_shapes=[pltpu.SemaphoreType.DMA((TILE_R,))],
    )

    out = pl.pallas_call(
        fused_forward_kernel,
        out_shape=jax.ShapeDtypeStruct((ROWS, E_PAD), jnp.float32),
        grid_spec=grid_spec,
        compiler_params=pltpu.CompilerParams(
            dimension_semantics=("parallel",),     # row tiles are independent
            vmem_limit_bytes=32 * 1024 * 1024,     # safe on v5e/v6e/v7x scoped limits
        ),
    )(q_arr, tok_flat, prefix, wte_pad,
      params["w1"], params["b1"], params["w2"], params["b2"],
      w3_pad, b3_pad)

    # slice the lane padding off outside the kernel
    out = out[:, :EMBED].reshape(BATCH, SEQ, EMBED)

    # TODO(synk): self.gpt(inputs_embeds=embedding, attention_mask=mask) omitted
    # (pretrained GPT-2-XL + LoRA); returning the fused inputs_embeds tensor.
    return out


# ----------------- pure-JAX reference -----------------------------------------
def reference(prefix, tokens, q_len, params):
    h = jnp.tanh(prefix @ params["w1"] + params["b1"])
    h = jnp.tanh(h @ params["w2"] + params["b2"])
    proj = (h @ params["w3"] + params["b3"]).reshape(BATCH, PREFIX_LEN, EMBED)
    emb = params["wte"][tokens]
    emb = emb.at[:, q_len:q_len + PREFIX_LEN, :].set(proj)
    return emb


# ----------------- deterministic init + run ------------------------------------
def init_params(key):
    ks = jax.random.split(key, 7)
    s = 0.05
    return {
        "w1": s * jax.random.normal(ks[0], (PREFIX_SIZE, H1), jnp.float32),
        "b1": s * jax.random.normal(ks[1], (1, H1), jnp.float32),
        "w2": s * jax.random.normal(ks[2], (H1, H2), jnp.float32),
        "b2": s * jax.random.normal(ks[3], (1, H2), jnp.float32),
        "w3": s * jax.random.normal(ks[4], (H2, PREFIX_LEN * EMBED), jnp.float32),
        "b3": s * jax.random.normal(ks[5], (1, PREFIX_LEN * EMBED), jnp.float32),
        "wte": s * jax.random.normal(ks[6], (VOCAB, EMBED), jnp.float32),
    }


if __name__ == "__main__":
    key = jax.random.PRNGKey(0)
    k_par, k_pref, k_tok = jax.random.split(key, 3)

    params = init_params(k_par)
    prefix = jax.random.normal(k_pref, (BATCH, PREFIX_SIZE), jnp.float32)
    tokens = jax.random.randint(k_tok, (BATCH, SEQ), 0, VOCAB, jnp.int32)
    mask = jnp.ones((BATCH, SEQ), jnp.float32)

    out = vqamed_forward(prefix, tokens, mask, Q_LEN, params)
    out = jax.block_until_ready(out)

    ref = reference(prefix, tokens, Q_LEN, params)
    assert out.shape == (BATCH, SEQ, EMBED)
    assert jnp.allclose(out, ref, atol=1e-5, rtol=1e-5)

    print("KERNEL_OK")
</pallas_src>

<mosaic_0001>
module attributes {stable_mosaic.version = 11 : i64} {
  func.func @fused_forward_kernel(%arg0: i32, %arg1: memref<1xi32, #tpu.memory_space<smem>>, %arg2: memref<32xi32, #tpu.memory_space<smem>>, %arg3: memref<2x64xf32, #tpu.memory_space<vmem>>, %arg4: memref<128x128xf32, #tpu.memory_space<any>>, %arg5: memref<64x32xf32, #tpu.memory_space<vmem>>, %arg6: memref<1x32xf32, #tpu.memory_space<vmem>>, %arg7: memref<32x64xf32, #tpu.memory_space<vmem>>, %arg8: memref<1x64xf32, #tpu.memory_space<vmem>>, %arg9: memref<64x256xf32, #tpu.memory_space<vmem>>, %arg10: memref<1x256xf32, #tpu.memory_space<vmem>>, %arg11: memref<16x128xf32, #tpu.memory_space<vmem>>, %arg12: memref<16x!tpu.dma_semaphore, #tpu.memory_space<semaphore_mem>>) attributes {dimension_semantics = [#tpu.dimension_semantics<parallel>], iteration_bounds = array<i64: 2>, scalar_prefetch = 2 : i64, scratch_operands = 1 : i64, tpu.core_type = #tpu.core_type<tc>, window_params = [{pipeline_mode = #tpu.pipeline_mode<synchronous>, transform_indices = @transform_0, window_bounds = array<i64: 2, 64>}, {}, {pipeline_mode = #tpu.pipeline_mode<synchronous>, transform_indices = @transform_2, window_bounds = array<i64: 64, 32>}, {pipeline_mode = #tpu.pipeline_mode<synchronous>, transform_indices = @transform_3, window_bounds = array<i64: 1, 32>}, {pipeline_mode = #tpu.pipeline_mode<synchronous>, transform_indices = @transform_4, window_bounds = array<i64: 32, 64>}, {pipeline_mode = #tpu.pipeline_mode<synchronous>, transform_indices = @transform_5, window_bounds = array<i64: 1, 64>}, {pipeline_mode = #tpu.pipeline_mode<synchronous>, transform_indices = @transform_6, window_bounds = array<i64: 64, 256>}, {pipeline_mode = #tpu.pipeline_mode<synchronous>, transform_indices = @transform_7, window_bounds = array<i64: 1, 256>}, {transform_indices = @transform_8, window_bounds = array<i64: 16, 128>}]} {
    %c16_i32 = arith.constant 16 : i32
    %0 = arith.muli %arg0, %c16_i32 : i32
    %c0_i32 = arith.constant 0 : i32
    %1 = arith.addi %0, %c0_i32 : i32
    %2 = arith.index_cast %1 : i32 to index
    %3 = memref.load %arg2[%2] : memref<32xi32, #tpu.memory_space<smem>>
    %c0_i32_0 = arith.constant 0 : i32
    %c0_i32_1 = arith.constant 0 : i32
    %4 = tpu.memref_slice %arg4[%3, %c0_i32_1] : memref<128x128xf32, #tpu.memory_space<any>> -> memref<1x128xf32, #tpu.memory_space<any>>
    %c0_i32_2 = arith.constant 0 : i32
    %c0_i32_3 = arith.constant 0 : i32
    %5 = tpu.memref_slice %arg11[%c0_i32_2, %c0_i32_3] : memref<16x128xf32, #tpu.memory_space<vmem>> -> memref<1x128xf32, #tpu.memory_space<vmem>>
    %6 = tpu.memref_slice %arg12[%c0_i32_0] : memref<16x!tpu.dma_semaphore, #tpu.memory_space<semaphore_mem>> -> memref<1x!tpu.dma_semaphore, #tpu.memory_space<semaphore_mem>>
    %7 = tpu.memref_squeeze %6 : memref<1x!tpu.dma_semaphore, #tpu.memory_space<semaphore_mem>> -> memref<!tpu.dma_semaphore, #tpu.memory_space<semaphore_mem>>
    tpu.enqueue_dma source(%4 : memref<1x128xf32, #tpu.memory_space<any>>) target(%5 : memref<1x128xf32, #tpu.memory_space<vmem>>) target_semaphore(%7 : memref<!tpu.dma_semaphore, #tpu.memory_space<semaphore_mem>>)
    %c1_i32 = arith.constant 1 : i32
    %8 = arith.addi %0, %c1_i32 : i32
    %9 = arith.index_cast %8 : i32 to index
    %10 = memref.load %arg2[%9] : memref<32xi32, #tpu.memory_space<smem>>
    %c1_i32_4 = arith.constant 1 : i32
    %c0_i32_5 = arith.constant 0 : i32
    %11 = tpu.memref_slice %arg4[%10, %c0_i32_5] : memref<128x128xf32, #tpu.memory_space<any>> -> memref<1x128xf32, #tpu.memory_space<any>>
    %c1_i32_6 = arith.constant 1 : i32
    %c0_i32_7 = arith.constant 0 : i32
    %12 = tpu.memref_slice %arg11[%c1_i32_6, %c0_i32_7] : memref<16x128xf32, #tpu.memory_space<vmem>> -> memref<1x128xf32, #tpu.memory_space<vmem>>
    %13 = tpu.memref_slice %arg12[%c1_i32_4] : memref<16x!tpu.dma_semaphore, #tpu.memory_space<semaphore_mem>> -> memref<1x!tpu.dma_semaphore, #tpu.memory_space<semaphore_mem>>
    %14 = tpu.memref_squeeze %13 : memref<1x!tpu.dma_semaphore, #tpu.memory_space<semaphore_mem>> -> memref<!tpu.dma_semaphore, #tpu.memory_space<semaphore_mem>>
    tpu.enqueue_dma source(%11 : memref<1x128xf32, #tpu.memory_space<any>>) target(%12 : memref<1x128xf32, #tpu.memory_space<vmem>>) target_semaphore(%14 : memref<!tpu.dma_semaphore, #tpu.memory_space<semaphore_mem>>)
    %c2_i32 = arith.constant 2 : i32
    %15 = arith.addi %0, %c2_i32 : i32
    %16 = arith.index_cast %15 : i32 to index
    %17 = memref.load %arg2[%16] : memref<32xi32, #tpu.memory_space<smem>>
    %c2_i32_8 = arith.constant 2 : i32
    %c0_i32_9 = arith.constant 0 : i32
    %18 = tpu.memref_slice %arg4[%17, %c0_i32_9] : memref<128x128xf32, #tpu.memory_space<any>> -> memref<1x128xf32, #tpu.memory_space<any>>
    %c2_i32_10 = arith.constant 2 : i32
    %c0_i32_11 = arith.constant 0 : i32
    %19 = tpu.memref_slice %arg11[%c2_i32_10, %c0_i32_11] : memref<16x128xf32, #tpu.memory_space<vmem>> -> memref<1x128xf32, #tpu.memory_space<vmem>>
    %20 = tpu.memref_slice %arg12[%c2_i32_8] : memref<16x!tpu.dma_semaphore, #tpu.memory_space<semaphore_mem>> -> memref<1x!tpu.dma_semaphore, #tpu.memory_space<semaphore_mem>>
    %21 = tpu.memref_squeeze %20 : memref<1x!tpu.dma_semaphore, #tpu.memory_space<semaphore_mem>> -> memref<!tpu.dma_semaphore, #tpu.memory_space<semaphore_mem>>
    tpu.enqueue_dma source(%18 : memref<1x128xf32, #tpu.memory_space<any>>) target(%19 : memref<1x128xf32, #tpu.memory_space<vmem>>) target_semaphore(%21 : memref<!tpu.dma_semaphore, #tpu.memory_space<semaphore_mem>>)
    %c3_i32 = arith.constant 3 : i32
    %22 = arith.addi %0, %c3_i32 : i32
    %23 = arith.index_cast %22 : i32 to index
    %24 = memref.load %arg2[%23] : memref<32xi32, #tpu.memory_space<smem>>
    %c3_i32_12 = arith.constant 3 : i32
    %c0_i32_13 = arith.constant 0 : i32
    %25 = tpu.memref_slice %arg4[%24, %c0_i32_13] : memref<128x128xf32, #tpu.memory_space<any>> -> memref<1x128xf32, #tpu.memory_space<any>>
    %c3_i32_14 = arith.constant 3 : i32
    %c0_i32_15 = arith.constant 0 : i32
    %26 = tpu.memref_slice %arg11[%c3_i32_14, %c0_i32_15] : memref<16x128xf32, #tpu.memory_space<vmem>> -> memref<1x128xf32, #tpu.memory_space<vmem>>
    %27 = tpu.memref_slice %arg12[%c3_i32_12] : memref<16x!tpu.dma_semaphore, #tpu.memory_space<semaphore_mem>> -> memref<1x!tpu.dma_semaphore, #tpu.memory_space<semaphore_mem>>
    %28 = tpu.memref_squeeze %27 : memref<1x!tpu.dma_semaphore, #tpu.memory_space<semaphore_mem>> -> memref<!tpu.dma_semaphore, #tpu.memory_space<semaphore_mem>>
    tpu.enqueue_dma source(%25 : memref<1x128xf32, #tpu.memory_space<any>>) target(%26 : memref<1x128xf32, #tpu.memory_space<vmem>>) target_semaphore(%28 : memref<!tpu.dma_semaphore, #tpu.memory_space<semaphore_mem>>)
    %c4_i32 = arith.constant 4 : i32
    %29 = arith.addi %0, %c4_i32 : i32
    %30 = arith.index_cast %29 : i32 to index
    %31 = memref.load %arg2[%30] : memref<32xi32, #tpu.memory_space<smem>>
    %c4_i32_16 = arith.constant 4 : i32
    %c0_i32_17 = arith.constant 0 : i32
    %32 = tpu.memref_slice %arg4[%31, %c0_i32_17] : memref<128x128xf32, #tpu.memory_space<any>> -> memref<1x128xf32, #tpu.memory_space<any>>
    %c4_i32_18 = arith.constant 4 : i32
    %c0_i32_19 = arith.constant 0 : i32
    %33 = tpu.memref_slice %arg11[%c4_i32_18, %c0_i32_19] : memref<16x128xf32, #tpu.memory_space<vmem>> -> memref<1x128xf32, #tpu.memory_space<vmem>>
    %34 = tpu.memref_slice %arg12[%c4_i32_16] : memref<16x!tpu.dma_semaphore, #tpu.memory_space<semaphore_mem>> -> memref<1x!tpu.dma_semaphore, #tpu.memory_space<semaphore_mem>>
    %35 = tpu.memref_squeeze %34 : memref<1x!tpu.dma_semaphore, #tpu.memory_space<semaphore_mem>> -> memref<!tpu.dma_semaphore, #tpu.memory_space<semaphore_mem>>
    tpu.enqueue_dma source(%32 : memref<1x128xf32, #tpu.memory_space<any>>) target(%33 : memref<1x128xf32, #tpu.memory_space<vmem>>) target_semaphore(%35 : memref<!tpu.dma_semaphore, #tpu.memory_space<semaphore_mem>>)
    %c5_i32 = arith.constant 5 : i32
    %36 = arith.addi %0, %c5_i32 : i32
    %37 = arith.index_cast %36 : i32 to index
    %38 = memref.load %arg2[%37] : memref<32xi32, #tpu.memory_space<smem>>
    %c5_i32_20 = arith.constant 5 : i32
    %c0_i32_21 = arith.constant 0 : i32
    %39 = tpu.memref_slice %arg4[%38, %c0_i32_21] : memref<128x128xf32, #tpu.memory_space<any>> -> memref<1x128xf32, #tpu.memory_space<any>>
    %c5_i32_22 = arith.constant 5 : i32
    %c0_i32_23 = arith.constant 0 : i32
    %40 = tpu.memref_slice %arg11[%c5_i32_22, %c0_i32_23] : memref<16x128xf32, #tpu.memory_space<vmem>> -> memref<1x128xf32, #tpu.memory_space<vmem>>
    %41 = tpu.memref_slice %arg12[%c5_i32_20] : memref<16x!tpu.dma_semaphore, #tpu.memory_space<semaphore_mem>> -> memref<1x!tpu.dma_semaphore, #tpu.memory_space<semaphore_mem>>
    %42 = tpu.memref_squeeze %41 : memref<1x!tpu.dma_semaphore, #tpu.memory_space<semaphore_mem>> -> memref<!tpu.dma_semaphore, #tpu.memory_space<semaphore_mem>>
    tpu.enqueue_dma source(%39 : memref<1x128xf32, #tpu.memory_space<any>>) target(%40 : memref<1x128xf32, #tpu.memory_space<vmem>>) target_semaphore(%42 : memref<!tpu.dma_semaphore, #tpu.memory_space<semaphore_mem>>)
    %c6_i32 = arith.constant 6 : i32
    %43 = arith.addi %0, %c6_i32 : i32
    %44 = arith.index_cast %43 : i32 to index
    %45 = memref.load %arg2[%44] : memref<32xi32, #tpu.memory_space<smem>>
    %c6_i32_24 = arith.constant 6 : i32
    %c0_i32_25 = arith.constant 0 : i32
    %46 = tpu.memref_slice %arg4[%45, %c0_i32_25] : memref<128x128xf32, #tpu.memory_space<any>> -> memref<1x128xf32, #tpu.memory_space<any>>
    %c6_i32_26 = arith.constant 6 : i32
    %c0_i32_27 = arith.constant 0 : i32
    %47 = tpu.memref_slice %arg11[%c6_i32_26, %c0_i32_27] : memref<16x128xf32, #tpu.memory_space<vmem>> -> memref<1x128xf32, #tpu.memory_space<vmem>>
    %48 = tpu.memref_slice %arg12[%c6_i32_24] : memref<16x!tpu.dma_semaphore, #tpu.memory_space<semaphore_mem>> -> memref<1x!tpu.dma_semaphore, #tpu.memory_space<semaphore_mem>>
    %49 = tpu.memref_squeeze %48 : memref<1x!tpu.dma_semaphore, #tpu.memory_space<semaphore_mem>> -> memref<!tpu.dma_semaphore, #tpu.memory_space<semaphore_mem>>
    tpu.enqueue_dma source(%46 : memref<1x128xf32, #tpu.memory_space<any>>) target(%47 : memref<1x128xf32, #tpu.memory_space<vmem>>) target_semaphore(%49 : memref<!tpu.dma_semaphore, #tpu.memory_space<semaphore_mem>>)
    %c7_i32 = arith.constant 7 : i32
    %50 = arith.addi %0, %c7_i32 : i32
    %51 = arith.index_cast %50 : i32 to index
    %52 = memref.load %arg2[%51] : memref<32xi32, #tpu.memory_space<smem>>
    %c7_i32_28 = arith.constant 7 : i32
    %c0_i32_29 = arith.constant 0 : i32
    %53 = tpu.memref_slice %arg4[%52, %c0_i32_29] : memref<128x128xf32, #tpu.memory_space<any>> -> memref<1x128xf32, #tpu.memory_space<any>>
    %c7_i32_30 = arith.constant 7 : i32
    %c0_i32_31 = arith.constant 0 : i32
    %54 = tpu.memref_slice %arg11[%c7_i32_30, %c0_i32_31] : memref<16x128xf32, #tpu.memory_space<vmem>> -> memref<1x128xf32, #tpu.memory_space<vmem>>
    %55 = tpu.memref_slice %arg12[%c7_i32_28] : memref<16x!tpu.dma_semaphore, #tpu.memory_space<semaphore_mem>> -> memref<1x!tpu.dma_semaphore, #tpu.memory_space<semaphore_mem>>
    %56 = tpu.memref_squeeze %55 : memref<1x!tpu.dma_semaphore, #tpu.memory_space<semaphore_mem>> -> memref<!tpu.dma_semaphore, #tpu.memory_space<semaphore_mem>>
    tpu.enqueue_dma source(%53 : memref<1x128xf32, #tpu.memory_space<any>>) target(%54 : memref<1x128xf32, #tpu.memory_space<vmem>>) target_semaphore(%56 : memref<!tpu.dma_semaphore, #tpu.memory_space<semaphore_mem>>)
    %c8_i32 = arith.constant 8 : i32
    %57 = arith.addi %0, %c8_i32 : i32
    %58 = arith.index_cast %57 : i32 to index
    %59 = memref.load %arg2[%58] : memref<32xi32, #tpu.memory_space<smem>>
    %c8_i32_32 = arith.constant 8 : i32
    %c0_i32_33 = arith.constant 0 : i32
    %60 = tpu.memref_slice %arg4[%59, %c0_i32_33] : memref<128x128xf32, #tpu.memory_space<any>> -> memref<1x128xf32, #tpu.memory_space<any>>
    %c8_i32_34 = arith.constant 8 : i32
    %c0_i32_35 = arith.constant 0 : i32
    %61 = tpu.memref_slice %arg11[%c8_i32_34, %c0_i32_35] : memref<16x128xf32, #tpu.memory_space<vmem>> -> memref<1x128xf32, #tpu.memory_space<vmem>>
    %62 = tpu.memref_slice %arg12[%c8_i32_32] : memref<16x!tpu.dma_semaphore, #tpu.memory_space<semaphore_mem>> -> memref<1x!tpu.dma_semaphore, #tpu.memory_space<semaphore_mem>>
    %63 = tpu.memref_squeeze %62 : memref<1x!tpu.dma_semaphore, #tpu.memory_space<semaphore_mem>> -> memref<!tpu.dma_semaphore, #tpu.memory_space<semaphore_mem>>
    tpu.enqueue_dma source(%60 : memref<1x128xf32, #tpu.memory_space<any>>) target(%61 : memref<1x128xf32, #tpu.memory_space<vmem>>) target_semaphore(%63 : memref<!tpu.dma_semaphore, #tpu.memory_space<semaphore_mem>>)
    %c9_i32 = arith.constant 9 : i32
    %64 = arith.addi %0, %c9_i32 : i32
    %65 = arith.index_cast %64 : i32 to index
    %66 = memref.load %arg2[%65] : memref<32xi32, #tpu.memory_space<smem>>
    %c9_i32_36 = arith.constant 9 : i32
    %c0_i32_37 = arith.constant 0 : i32
    %67 = tpu.memref_slice %arg4[%66, %c0_i32_37] : memref<128x128xf32, #tpu.memory_space<any>> -> memref<1x128xf32, #tpu.memory_space<any>>
    %c9_i32_38 = arith.constant 9 : i32
    %c0_i32_39 = arith.constant 0 : i32
    %68 = tpu.memref_slice %arg11[%c9_i32_38, %c0_i32_39] : memref<16x128xf32, #tpu.memory_space<vmem>> -> memref<1x128xf32, #tpu.memory_space<vmem>>
    %69 = tpu.memref_slice %arg12[%c9_i32_36] : memref<16x!tpu.dma_semaphore, #tpu.memory_space<semaphore_mem>> -> memref<1x!tpu.dma_semaphore, #tpu.memory_space<semaphore_mem>>
    %70 = tpu.memref_squeeze %69 : memref<1x!tpu.dma_semaphore, #tpu.memory_space<semaphore_mem>> -> memref<!tpu.dma_semaphore, #tpu.memory_space<semaphore_mem>>
    tpu.enqueue_dma source(%67 : memref<1x128xf32, #tpu.memory_space<any>>) target(%68 : memref<1x128xf32, #tpu.memory_space<vmem>>) target_semaphore(%70 : memref<!tpu.dma_semaphore, #tpu.memory_space<semaphore_mem>>)
    %c10_i32 = arith.constant 10 : i32
    %71 = arith.addi %0, %c10_i32 : i32
    %72 = arith.index_cast %71 : i32 to index
    %73 = memref.load %arg2[%72] : memref<32xi32, #tpu.memory_space<smem>>
    %c10_i32_40 = arith.constant 10 : i32
    %c0_i32_41 = arith.constant 0 : i32
    %74 = tpu.memref_slice %arg4[%73, %c0_i32_41] : memref<128x128xf32, #tpu.memory_space<any>> -> memref<1x128xf32, #tpu.memory_space<any>>
    %c10_i32_42 = arith.constant 10 : i32
    %c0_i32_43 = arith.constant 0 : i32
    %75 = tpu.memref_slice %arg11[%c10_i32_42, %c0_i32_43] : memref<16x128xf32, #tpu.memory_space<vmem>> -> memref<1x128xf32, #tpu.memory_space<vmem>>
    %76 = tpu.memref_slice %arg12[%c10_i32_40] : memref<16x!tpu.dma_semaphore, #tpu.memory_space<semaphore_mem>> -> memref<1x!tpu.dma_semaphore, #tpu.memory_space<semaphore_mem>>
    %77 = tpu.memref_squeeze %76 : memref<1x!tpu.dma_semaphore, #tpu.memory_space<semaphore_mem>> -> memref<!tpu.dma_semaphore, #tpu.memory_space<semaphore_mem>>
    tpu.enqueue_dma source(%74 : memref<1x128xf32, #tpu.memory_space<any>>) target(%75 : memref<1x128xf32, #tpu.memory_space<vmem>>) target_semaphore(%77 : memref<!tpu.dma_semaphore, #tpu.memory_space<semaphore_mem>>)
    %c11_i32 = arith.constant 11 : i32
    %78 = arith.addi %0, %c11_i32 : i32
    %79 = arith.index_cast %78 : i32 to index
    %80 = memref.load %arg2[%79] : memref<32xi32, #tpu.memory_space<smem>>
    %c11_i32_44 = arith.constant 11 : i32
    %c0_i32_45 = arith.constant 0 : i32
    %81 = tpu.memref_slice %arg4[%80, %c0_i32_45] : memref<128x128xf32, #tpu.memory_space<any>> -> memref<1x128xf32, #tpu.memory_space<any>>
    %c11_i32_46 = arith.constant 11 : i32
    %c0_i32_47 = arith.constant 0 : i32
    %82 = tpu.memref_slice %arg11[%c11_i32_46, %c0_i32_47] : memref<16x128xf32, #tpu.memory_space<vmem>> -> memref<1x128xf32, #tpu.memory_space<vmem>>
    %83 = tpu.memref_slice %arg12[%c11_i32_44] : memref<16x!tpu.dma_semaphore, #tpu.memory_space<semaphore_mem>> -> memref<1x!tpu.dma_semaphore, #tpu.memory_space<semaphore_mem>>
    %84 = tpu.memref_squeeze %83 : memref<1x!tpu.dma_semaphore, #tpu.memory_space<semaphore_mem>> -> memref<!tpu.dma_semaphore, #tpu.memory_space<semaphore_mem>>
    tpu.enqueue_dma source(%81 : memref<1x128xf32, #tpu.memory_space<any>>) target(%82 : memref<1x128xf32, #tpu.memory_space<vmem>>) target_semaphore(%84 : memref<!tpu.dma_semaphore, #tpu.memory_space<semaphore_mem>>)
    %c12_i32 = arith.constant 12 : i32
    %85 = arith.addi %0, %c12_i32 : i32
    %86 = arith.index_cast %85 : i32 to index
    %87 = memref.load %arg2[%86] : memref<32xi32, #tpu.memory_space<smem>>
    %c12_i32_48 = arith.constant 12 : i32
    %c0_i32_49 = arith.constant 0 : i32
    %88 = tpu.memref_slice %arg4[%87, %c0_i32_49] : memref<128x128xf32, #tpu.memory_space<any>> -> memref<1x128xf32, #tpu.memory_space<any>>
    %c12_i32_50 = arith.constant 12 : i32
    %c0_i32_51 = arith.constant 0 : i32
    %89 = tpu.memref_slice %arg11[%c12_i32_50, %c0_i32_51] : memref<16x128xf32, #tpu.memory_space<vmem>> -> memref<1x128xf32, #tpu.memory_space<vmem>>
    %90 = tpu.memref_slice %arg12[%c12_i32_48] : memref<16x!tpu.dma_semaphore, #tpu.memory_space<semaphore_mem>> -> memref<1x!tpu.dma_semaphore, #tpu.memory_space<semaphore_mem>>
    %91 = tpu.memref_squeeze %90 : memref<1x!tpu.dma_semaphore, #tpu.memory_space<semaphore_mem>> -> memref<!tpu.dma_semaphore, #tpu.memory_space<semaphore_mem>>
    tpu.enqueue_dma source(%88 : memref<1x128xf32, #tpu.memory_space<any>>) target(%89 : memref<1x128xf32, #tpu.memory_space<vmem>>) target_semaphore(%91 : memref<!tpu.dma_semaphore, #tpu.memory_space<semaphore_mem>>)
    %c13_i32 = arith.constant 13 : i32
    %92 = arith.addi %0, %c13_i32 : i32
    %93 = arith.index_cast %92 : i32 to index
    %94 = memref.load %arg2[%93] : memref<32xi32, #tpu.memory_space<smem>>
    %c13_i32_52 = arith.constant 13 : i32
    %c0_i32_53 = arith.constant 0 : i32
    %95 = tpu.memref_slice %arg4[%94, %c0_i32_53] : memref<128x128xf32, #tpu.memory_space<any>> -> memref<1x128xf32, #tpu.memory_space<any>>
    %c13_i32_54 = arith.constant 13 : i32
    %c0_i32_55 = arith.constant 0 : i32
    %96 = tpu.memref_slice %arg11[%c13_i32_54, %c0_i32_55] : memref<16x128xf32, #tpu.memory_space<vmem>> -> memref<1x128xf32, #tpu.memory_space<vmem>>
    %97 = tpu.memref_slice %arg12[%c13_i32_52] : memref<16x!tpu.dma_semaphore, #tpu.memory_space<semaphore_mem>> -> memref<1x!tpu.dma_semaphore, #tpu.memory_space<semaphore_mem>>
    %98 = tpu.memref_squeeze %97 : memref<1x!tpu.dma_semaphore, #tpu.memory_space<semaphore_mem>> -> memref<!tpu.dma_semaphore, #tpu.memory_space<semaphore_mem>>
    tpu.enqueue_dma source(%95 : memref<1x128xf32, #tpu.memory_space<any>>) target(%96 : memref<1x128xf32, #tpu.memory_space<vmem>>) target_semaphore(%98 : memref<!tpu.dma_semaphore, #tpu.memory_space<semaphore_mem>>)
    %c14_i32 = arith.constant 14 : i32
    %99 = arith.addi %0, %c14_i32 : i32
    %100 = arith.index_cast %99 : i32 to index
    %101 = memref.load %arg2[%100] : memref<32xi32, #tpu.memory_space<smem>>
    %c14_i32_56 = arith.constant 14 : i32
    %c0_i32_57 = arith.constant 0 : i32
    %102 = tpu.memref_slice %arg4[%101, %c0_i32_57] : memref<128x128xf32, #tpu.memory_space<any>> -> memref<1x128xf32, #tpu.memory_space<any>>
    %c14_i32_58 = arith.constant 14 : i32
    %c0_i32_59 = arith.constant 0 : i32
    %103 = tpu.memref_slice %arg11[%c14_i32_58, %c0_i32_59] : memref<16x128xf32, #tpu.memory_space<vmem>> -> memref<1x128xf32, #tpu.memory_space<vmem>>
    %104 = tpu.memref_slice %arg12[%c14_i32_56] : memref<16x!tpu.dma_semaphore, #tpu.memory_space<semaphore_mem>> -> memref<1x!tpu.dma_semaphore, #tpu.memory_space<semaphore_mem>>
    %105 = tpu.memref_squeeze %104 : memref<1x!tpu.dma_semaphore, #tpu.memory_space<semaphore_mem>> -> memref<!tpu.dma_semaphore, #tpu.memory_space<semaphore_mem>>
    tpu.enqueue_dma source(%102 : memref<1x128xf32, #tpu.memory_space<any>>) target(%103 : memref<1x128xf32, #tpu.memory_space<vmem>>) target_semaphore(%105 : memref<!tpu.dma_semaphore, #tpu.memory_space<semaphore_mem>>)
    %c15_i32 = arith.constant 15 : i32
    %106 = arith.addi %0, %c15_i32 : i32
    %107 = arith.index_cast %106 : i32 to index
    %108 = memref.load %arg2[%107] : memref<32xi32, #tpu.memory_space<smem>>
    %c15_i32_60 = arith.constant 15 : i32
    %c0_i32_61 = arith.constant 0 : i32
    %109 = tpu.memref_slice %arg4[%108, %c0_i32_61] : memref<128x128xf32, #tpu.memory_space<any>> -> memref<1x128xf32, #tpu.memory_space<any>>
    %c15_i32_62 = arith.constant 15 : i32
    %c0_i32_63 = arith.constant 0 : i32
    %110 = tpu.memref_slice %arg11[%c15_i32_62, %c0_i32_63] : memref<16x128xf32, #tpu.memory_space<vmem>> -> memref<1x128xf32, #tpu.memory_space<vmem>>
    %111 = tpu.memref_slice %arg12[%c15_i32_60] : memref<16x!tpu.dma_semaphore, #tpu.memory_space<semaphore_mem>> -> memref<1x!tpu.dma_semaphore, #tpu.memory_space<semaphore_mem>>
    %112 = tpu.memref_squeeze %111 : memref<1x!tpu.dma_semaphore, #tpu.memory_space<semaphore_mem>> -> memref<!tpu.dma_semaphore, #tpu.memory_space<semaphore_mem>>
    tpu.enqueue_dma source(%109 : memref<1x128xf32, #tpu.memory_space<any>>) target(%110 : memref<1x128xf32, #tpu.memory_space<vmem>>) target_semaphore(%112 : memref<!tpu.dma_semaphore, #tpu.memory_space<semaphore_mem>>)
    %c0 = arith.constant 0 : index
    %c0_64 = arith.constant 0 : index
    %113 = vector.load %arg3[%c0, %c0_64] : memref<2x64xf32, #tpu.memory_space<vmem>>, vector<2x64xf32>
    %c0_65 = arith.constant 0 : index
    %c0_66 = arith.constant 0 : index
    %114 = vector.load %arg5[%c0_65, %c0_66] : memref<64x32xf32, #tpu.memory_space<vmem>>, vector<64x32xf32>
    %cst = arith.constant dense<0.000000e+00> : vector<2x32xf32>
    %115 = tpu.matmul %113, %114, %cst {dimension_numbers = #tpu.dot_dimension_numbers<[1], [0], [0], [1], [0, 0, 1, 1], [], []>} : vector<2x64xf32>, vector<64x32xf32>, vector<2x32xf32> -> vector<2x32xf32>
    %c0_67 = arith.constant 0 : index
    %c0_68 = arith.constant 0 : index
    %116 = vector.load %arg6[%c0_67, %c0_68] : memref<1x32xf32, #tpu.memory_space<vmem>>, vector<1x32xf32>
    %117 = vector.broadcast %116 : vector<1x32xf32> to vector<2x32xf32>
    %118 = arith.addf %115, %117 : vector<2x32xf32>
    %119 = math.tanh %118 : vector<2x32xf32>
    %c0_69 = arith.constant 0 : index
    %c0_70 = arith.constant 0 : index
    %120 = vector.load %arg7[%c0_69, %c0_70] : memref<32x64xf32, #tpu.memory_space<vmem>>, vector<32x64xf32>
    %cst_71 = arith.constant dense<0.000000e+00> : vector<2x64xf32>
    %121 = tpu.matmul %119, %120, %cst_71 {dimension_numbers = #tpu.dot_dimension_numbers<[1], [0], [0], [1], [0, 0, 1, 1], [], []>} : vector<2x32xf32>, vector<32x64xf32>, vector<2x64xf32> -> vector<2x64xf32>
    %c0_72 = arith.constant 0 : index
    %c0_73 = arith.constant 0 : index
    %122 = vector.load %arg8[%c0_72, %c0_73] : memref<1x64xf32, #tpu.memory_space<vmem>>, vector<1x64xf32>
    %123 = vector.broadcast %122 : vector<1x64xf32> to vector<2x64xf32>
    %124 = arith.addf %121, %123 : vector<2x64xf32>
    %125 = math.tanh %124 : vector<2x64xf32>
    %c0_74 = arith.constant 0 : index
    %c0_75 = arith.constant 0 : index
    %126 = vector.load %arg9[%c0_74, %c0_75] : memref<64x256xf32, #tpu.memory_space<vmem>>, vector<64x256xf32>
    %cst_76 = arith.constant dense<0.000000e+00> : vector<2x256xf32>
    %127 = tpu.matmul %125, %126, %cst_76 {dimension_numbers = #tpu.dot_dimension_numbers<[1], [0], [0], [1], [0, 0, 1, 1], [], []>} : vector<2x64xf32>, vector<64x256xf32>, vector<2x256xf32> -> vector<2x256xf32>
    %c0_77 = arith.constant 0 : index
    %c0_78 = arith.constant 0 : index
    %128 = vector.load %arg10[%c0_77, %c0_78] : memref<1x256xf32, #tpu.memory_space<vmem>>, vector<1x256xf32>
    %129 = vector.broadcast %128 : vector<1x256xf32> to vector<2x256xf32>
    %130 = arith.addf %127, %129 : vector<2x256xf32>
    %c0_i32_79 = arith.constant 0 : i32
    %c0_i32_80 = arith.constant 0 : i32
    %c0_i32_81 = arith.constant 0 : i32
    %131 = tpu.memref_slice %arg4[%c0_i32_80, %c0_i32_81] : memref<128x128xf32, #tpu.memory_space<any>> -> memref<1x128xf32, #tpu.memory_space<any>>
    %c0_i32_82 = arith.constant 0 : i32
    %c0_i32_83 = arith.constant 0 : i32
    %132 = tpu.memref_slice %arg11[%c0_i32_82, %c0_i32_83] : memref<16x128xf32, #tpu.memory_space<vmem>> -> memref<1x128xf32, #tpu.memory_space<vmem>>
    %133 = tpu.memref_slice %arg12[%c0_i32_79] : memref<16x!tpu.dma_semaphore, #tpu.memory_space<semaphore_mem>> -> memref<1x!tpu.dma_semaphore, #tpu.memory_space<semaphore_mem>>
    %134 = tpu.memref_squeeze %133 : memref<1x!tpu.dma_semaphore, #tpu.memory_space<semaphore_mem>> -> memref<!tpu.dma_semaphore, #tpu.memory_space<semaphore_mem>>
    tpu.wait_dma2 semaphore(%134 : memref<!tpu.dma_semaphore, #tpu.memory_space<semaphore_mem>>) src(%131 : memref<1x128xf32, #tpu.memory_space<any>>) dst(%132 : memref<1x128xf32, #tpu.memory_space<vmem>>)
    %c1_i32_84 = arith.constant 1 : i32
    %c0_i32_85 = arith.constant 0 : i32
    %c0_i32_86 = arith.constant 0 : i32
    %135 = tpu.memref_slice %arg4[%c0_i32_85, %c0_i32_86] : memref<128x128xf32, #tpu.memory_space<any>> -> memref<1x128xf32, #tpu.memory_space<any>>
    %c1_i32_87 = arith.constant 1 : i32
    %c0_i32_88 = arith.constant 0 : i32
    %136 = tpu.memref_slice %arg11[%c1_i32_87, %c0_i32_88] : memref<16x128xf32, #tpu.memory_space<vmem>> -> memref<1x128xf32, #tpu.memory_space<vmem>>
    %137 = tpu.memref_slice %arg12[%c1_i32_84] : memref<16x!tpu.dma_semaphore, #tpu.memory_space<semaphore_mem>> -> memref<1x!tpu.dma_semaphore, #tpu.memory_space<semaphore_mem>>
    %138 = tpu.memref_squeeze %137 : memref<1x!tpu.dma_semaphore, #tpu.memory_space<semaphore_mem>> -> memref<!tpu.dma_semaphore, #tpu.memory_space<semaphore_mem>>
    tpu.wait_dma2 semaphore(%138 : memref<!tpu.dma_semaphore, #tpu.memory_space<semaphore_mem>>) src(%135 : memref<1x128xf32, #tpu.memory_space<any>>) dst(%136 : memref<1x128xf32, #tpu.memory_space<vmem>>)
    %c2_i32_89 = arith.constant 2 : i32
    %c0_i32_90 = arith.constant 0 : i32
    %c0_i32_91 = arith.constant 0 : i32
    %139 = tpu.memref_slice %arg4[%c0_i32_90, %c0_i32_91] : memref<128x128xf32, #tpu.memory_space<any>> -> memref<1x128xf32, #tpu.memory_space<any>>
    %c2_i32_92 = arith.constant 2 : i32
    %c0_i32_93 = arith.constant 0 : i32
    %140 = tpu.memref_slice %arg11[%c2_i32_92, %c0_i32_93] : memref<16x128xf32, #tpu.memory_space<vmem>> -> memref<1x128xf32, #tpu.memory_space<vmem>>
    %141 = tpu.memref_slice %arg12[%c2_i32_89] : memref<16x!tpu.dma_semaphore, #tpu.memory_space<semaphore_mem>> -> memref<1x!tpu.dma_semaphore, #tpu.memory_space<semaphore_mem>>
    %142 = tpu.memref_squeeze %141 : memref<1x!tpu.dma_semaphore, #tpu.memory_space<semaphore_mem>> -> memref<!tpu.dma_semaphore, #tpu.memory_space<semaphore_mem>>
    tpu.wait_dma2 semaphore(%142 : memref<!tpu.dma_semaphore, #tpu.memory_space<semaphore_mem>>) src(%139 : memref<1x128xf32, #tpu.memory_space<any>>) dst(%140 : memref<1x128xf32, #tpu.memory_space<vmem>>)
    %c3_i32_94 = arith.constant 3 : i32
    %c0_i32_95 = arith.constant 0 : i32
    %c0_i32_96 = arith.constant 0 : i32
    %143 = tpu.memref_slice %arg4[%c0_i32_95, %c0_i32_96] : memref<128x128xf32, #tpu.memory_space<any>> -> memref<1x128xf32, #tpu.memory_space<any>>
    %c3_i32_97 = arith.constant 3 : i32
    %c0_i32_98 = arith.constant 0 : i32
    %144 = tpu.memref_slice %arg11[%c3_i32_97, %c0_i32_98] : memref<16x128xf32, #tpu.memory_space<vmem>> -> memref<1x128xf32, #tpu.memory_space<vmem>>
    %145 = tpu.memref_slice %arg12[%c3_i32_94] : memref<16x!tpu.dma_semaphore, #tpu.memory_space<semaphore_mem>> -> memref<1x!tpu.dma_semaphore, #tpu.memory_space<semaphore_mem>>
    %146 = tpu.memref_squeeze %145 : memref<1x!tpu.dma_semaphore, #tpu.memory_space<semaphore_mem>> -> memref<!tpu.dma_semaphore, #tpu.memory_space<semaphore_mem>>
    tpu.wait_dma2 semaphore(%146 : memref<!tpu.dma_semaphore, #tpu.memory_space<semaphore_mem>>) src(%143 : memref<1x128xf32, #tpu.memory_space<any>>) dst(%144 : memref<1x128xf32, #tpu.memory_space<vmem>>)
    %c4_i32_99 = arith.constant 4 : i32
    %c0_i32_100 = arith.constant 0 : i32
    %c0_i32_101 = arith.constant 0 : i32
    %147 = tpu.memref_slice %arg4[%c0_i32_100, %c0_i32_101] : memref<128x128xf32, #tpu.memory_space<any>> -> memref<1x128xf32, #tpu.memory_space<any>>
    %c4_i32_102 = arith.constant 4 : i32
    %c0_i32_103 = arith.constant 0 : i32
    %148 = tpu.memref_slice %arg11[%c4_i32_102, %c0_i32_103] : memref<16x128xf32, #tpu.memory_space<vmem>> -> memref<1x128xf32, #tpu.memory_space<vmem>>
    %149 = tpu.memref_slice %arg12[%c4_i32_99] : memref<16x!tpu.dma_semaphore, #tpu.memory_space<semaphore_mem>> -> memref<1x!tpu.dma_semaphore, #tpu.memory_space<semaphore_mem>>
    %150 = tpu.memref_squeeze %149 : memref<1x!tpu.dma_semaphore, #tpu.memory_space<semaphore_mem>> -> memref<!tpu.dma_semaphore, #tpu.memory_space<semaphore_mem>>
    tpu.wait_dma2 semaphore(%150 : memref<!tpu.dma_semaphore, #tpu.memory_space<semaphore_mem>>) src(%147 : memref<1x128xf32, #tpu.memory_space<any>>) dst(%148 : memref<1x128xf32, #tpu.memory_space<vmem>>)
    %c5_i32_104 = arith.constant 5 : i32
    %c0_i32_105 = arith.constant 0 : i32
    %c0_i32_106 = arith.constant 0 : i32
    %151 = tpu.memref_slice %arg4[%c0_i32_105, %c0_i32_106] : memref<128x128xf32, #tpu.memory_space<any>> -> memref<1x128xf32, #tpu.memory_space<any>>
    %c5_i32_107 = arith.constant 5 : i32
    %c0_i32_108 = arith.constant 0 : i32
    %152 = tpu.memref_slice %arg11[%c5_i32_107, %c0_i32_108] : memref<16x128xf32, #tpu.memory_space<vmem>> -> memref<1x128xf32, #tpu.memory_space<vmem>>
    %153 = tpu.memref_slice %arg12[%c5_i32_104] : memref<16x!tpu.dma_semaphore, #tpu.memory_space<semaphore_mem>> -> memref<1x!tpu.dma_semaphore, #tpu.memory_space<semaphore_mem>>
    %154 = tpu.memref_squeeze %153 : memref<1x!tpu.dma_semaphore, #tpu.memory_space<semaphore_mem>> -> memref<!tpu.dma_semaphore, #tpu.memory_space<semaphore_mem>>
    tpu.wait_dma2 semaphore(%154 : memref<!tpu.dma_semaphore, #tpu.memory_space<semaphore_mem>>) src(%151 : memref<1x128xf32, #tpu.memory_space<any>>) dst(%152 : memref<1x128xf32, #tpu.memory_space<vmem>>)
    %c6_i32_109 = arith.constant 6 : i32
    %c0_i32_110 = arith.constant 0 : i32
    %c0_i32_111 = arith.constant 0 : i32
    %155 = tpu.memref_slice %arg4[%c0_i32_110, %c0_i32_111] : memref<128x128xf32, #tpu.memory_space<any>> -> memref<1x128xf32, #tpu.memory_space<any>>
    %c6_i32_112 = arith.constant 6 : i32
    %c0_i32_113 = arith.constant 0 : i32
    %156 = tpu.memref_slice %arg11[%c6_i32_112, %c0_i32_113] : memref<16x128xf32, #tpu.memory_space<vmem>> -> memref<1x128xf32, #tpu.memory_space<vmem>>
    %157 = tpu.memref_slice %arg12[%c6_i32_109] : memref<16x!tpu.dma_semaphore, #tpu.memory_space<semaphore_mem>> -> memref<1x!tpu.dma_semaphore, #tpu.memory_space<semaphore_mem>>
    %158 = tpu.memref_squeeze %157 : memref<1x!tpu.dma_semaphore, #tpu.memory_space<semaphore_mem>> -> memref<!tpu.dma_semaphore, #tpu.memory_space<semaphore_mem>>
    tpu.wait_dma2 semaphore(%158 : memref<!tpu.dma_semaphore, #tpu.memory_space<semaphore_mem>>) src(%155 : memref<1x128xf32, #tpu.memory_space<any>>) dst(%156 : memref<1x128xf32, #tpu.memory_space<vmem>>)
    %c7_i32_114 = arith.constant 7 : i32
    %c0_i32_115 = arith.constant 0 : i32
    %c0_i32_116 = arith.constant 0 : i32
    %159 = tpu.memref_slice %arg4[%c0_i32_115, %c0_i32_116] : memref<128x128xf32, #tpu.memory_space<any>> -> memref<1x128xf32, #tpu.memory_space<any>>
    %c7_i32_117 = arith.constant 7 : i32
    %c0_i32_118 = arith.constant 0 : i32
    %160 = tpu.memref_slice %arg11[%c7_i32_117, %c0_i32_118] : memref<16x128xf32, #tpu.memory_space<vmem>> -> memref<1x128xf32, #tpu.memory_space<vmem>>
    %161 = tpu.memref_slice %arg12[%c7_i32_114] : memref<16x!tpu.dma_semaphore, #tpu.memory_space<semaphore_mem>> -> memref<1x!tpu.dma_semaphore, #tpu.memory_space<semaphore_mem>>
    %162 = tpu.memref_squeeze %161 : memref<1x!tpu.dma_semaphore, #tpu.memory_space<semaphore_mem>> -> memref<!tpu.dma_semaphore, #tpu.memory_space<semaphore_mem>>
    tpu.wait_dma2 semaphore(%162 : memref<!tpu.dma_semaphore, #tpu.memory_space<semaphore_mem>>) src(%159 : memref<1x128xf32, #tpu.memory_space<any>>) dst(%160 : memref<1x128xf32, #tpu.memory_space<vmem>>)
    %c8_i32_119 = arith.constant 8 : i32
    %c0_i32_120 = arith.constant 0 : i32
    %c0_i32_121 = arith.constant 0 : i32
    %163 = tpu.memref_slice %arg4[%c0_i32_120, %c0_i32_121] : memref<128x128xf32, #tpu.memory_space<any>> -> memref<1x128xf32, #tpu.memory_space<any>>
    %c8_i32_122 = arith.constant 8 : i32
    %c0_i32_123 = arith.constant 0 : i32
    %164 = tpu.memref_slice %arg11[%c8_i32_122, %c0_i32_123] : memref<16x128xf32, #tpu.memory_space<vmem>> -> memref<1x128xf32, #tpu.memory_space<vmem>>
    %165 = tpu.memref_slice %arg12[%c8_i32_119] : memref<16x!tpu.dma_semaphore, #tpu.memory_space<semaphore_mem>> -> memref<1x!tpu.dma_semaphore, #tpu.memory_space<semaphore_mem>>
    %166 = tpu.memref_squeeze %165 : memref<1x!tpu.dma_semaphore, #tpu.memory_space<semaphore_mem>> -> memref<!tpu.dma_semaphore, #tpu.memory_space<semaphore_mem>>
    tpu.wait_dma2 semaphore(%166 : memref<!tpu.dma_semaphore, #tpu.memory_space<semaphore_mem>>) src(%163 : memref<1x128xf32, #tpu.memory_space<any>>) dst(%164 : memref<1x128xf32, #tpu.memory_space<vmem>>)
    %c9_i32_124 = arith.constant 9 : i32
    %c0_i32_125 = arith.constant 0 : i32
    %c0_i32_126 = arith.constant 0 : i32
    %167 = tpu.memref_slice %arg4[%c0_i32_125, %c0_i32_126] : memref<128x128xf32, #tpu.memory_space<any>> -> memref<1x128xf32, #tpu.memory_space<any>>
    %c9_i32_127 = arith.constant 9 : i32
    %c0_i32_128 = arith.constant 0 : i32
    %168 = tpu.memref_slice %arg11[%c9_i32_127, %c0_i32_128] : memref<16x128xf32, #tpu.memory_space<vmem>> -> memref<1x128xf32, #tpu.memory_space<vmem>>
    %169 = tpu.memref_slice %arg12[%c9_i32_124] : memref<16x!tpu.dma_semaphore, #tpu.memory_space<semaphore_mem>> -> memref<1x!tpu.dma_semaphore, #tpu.memory_space<semaphore_mem>>
    %170 = tpu.memref_squeeze %169 : memref<1x!tpu.dma_semaphore, #tpu.memory_space<semaphore_mem>> -> memref<!tpu.dma_semaphore, #tpu.memory_space<semaphore_mem>>
    tpu.wait_dma2 semaphore(%170 : memref<!tpu.dma_semaphore, #tpu.memory_space<semaphore_mem>>) src(%167 : memref<1x128xf32, #tpu.memory_space<any>>) dst(%168 : memref<1x128xf32, #tpu.memory_space<vmem>>)
    %c10_i32_129 = arith.constant 10 : i32
    %c0_i32_130 = arith.constant 0 : i32
    %c0_i32_131 = arith.constant 0 : i32
    %171 = tpu.memref_slice %arg4[%c0_i32_130, %c0_i32_131] : memref<128x128xf32, #tpu.memory_space<any>> -> memref<1x128xf32, #tpu.memory_space<any>>
    %c10_i32_132 = arith.constant 10 : i32
    %c0_i32_133 = arith.constant 0 : i32
    %172 = tpu.memref_slice %arg11[%c10_i32_132, %c0_i32_133] : memref<16x128xf32, #tpu.memory_space<vmem>> -> memref<1x128xf32, #tpu.memory_space<vmem>>
    %173 = tpu.memref_slice %arg12[%c10_i32_129] : memref<16x!tpu.dma_semaphore, #tpu.memory_space<semaphore_mem>> -> memref<1x!tpu.dma_semaphore, #tpu.memory_space<semaphore_mem>>
    %174 = tpu.memref_squeeze %173 : memref<1x!tpu.dma_semaphore, #tpu.memory_space<semaphore_mem>> -> memref<!tpu.dma_semaphore, #tpu.memory_space<semaphore_mem>>
    tpu.wait_dma2 semaphore(%174 : memref<!tpu.dma_semaphore, #tpu.memory_space<semaphore_mem>>) src(%171 : memref<1x128xf32, #tpu.memory_space<any>>) dst(%172 : memref<1x128xf32, #tpu.memory_space<vmem>>)
    %c11_i32_134 = arith.constant 11 : i32
    %c0_i32_135 = arith.constant 0 : i32
    %c0_i32_136 = arith.constant 0 : i32
    %175 = tpu.memref_slice %arg4[%c0_i32_135, %c0_i32_136] : memref<128x128xf32, #tpu.memory_space<any>> -> memref<1x128xf32, #tpu.memory_space<any>>
    %c11_i32_137 = arith.constant 11 : i32
    %c0_i32_138 = arith.constant 0 : i32
    %176 = tpu.memref_slice %arg11[%c11_i32_137, %c0_i32_138] : memref<16x128xf32, #tpu.memory_space<vmem>> -> memref<1x128xf32, #tpu.memory_space<vmem>>
    %177 = tpu.memref_slice %arg12[%c11_i32_134] : memref<16x!tpu.dma_semaphore, #tpu.memory_space<semaphore_mem>> -> memref<1x!tpu.dma_semaphore, #tpu.memory_space<semaphore_mem>>
    %178 = tpu.memref_squeeze %177 : memref<1x!tpu.dma_semaphore, #tpu.memory_space<semaphore_mem>> -> memref<!tpu.dma_semaphore, #tpu.memory_space<semaphore_mem>>
    tpu.wait_dma2 semaphore(%178 : memref<!tpu.dma_semaphore, #tpu.memory_space<semaphore_mem>>) src(%175 : memref<1x128xf32, #tpu.memory_space<any>>) dst(%176 : memref<1x128xf32, #tpu.memory_space<vmem>>)
    %c12_i32_139 = arith.constant 12 : i32
    %c0_i32_140 = arith.constant 0 : i32
    %c0_i32_141 = arith.constant 0 : i32
    %179 = tpu.memref_slice %arg4[%c0_i32_140, %c0_i32_141] : memref<128x128xf32, #tpu.memory_space<any>> -> memref<1x128xf32, #tpu.memory_space<any>>
    %c12_i32_142 = arith.constant 12 : i32
    %c0_i32_143 = arith.constant 0 : i32
    %180 = tpu.memref_slice %arg11[%c12_i32_142, %c0_i32_143] : memref<16x128xf32, #tpu.memory_space<vmem>> -> memref<1x128xf32, #tpu.memory_space<vmem>>
    %181 = tpu.memref_slice %arg12[%c12_i32_139] : memref<16x!tpu.dma_semaphore, #tpu.memory_space<semaphore_mem>> -> memref<1x!tpu.dma_semaphore, #tpu.memory_space<semaphore_mem>>
    %182 = tpu.memref_squeeze %181 : memref<1x!tpu.dma_semaphore, #tpu.memory_space<semaphore_mem>> -> memref<!tpu.dma_semaphore, #tpu.memory_space<semaphore_mem>>
    tpu.wait_dma2 semaphore(%182 : memref<!tpu.dma_semaphore, #tpu.memory_space<semaphore_mem>>) src(%179 : memref<1x128xf32, #tpu.memory_space<any>>) dst(%180 : memref<1x128xf32, #tpu.memory_space<vmem>>)
    %c13_i32_144 = arith.constant 13 : i32
    %c0_i32_145 = arith.constant 0 : i32
    %c0_i32_146 = arith.constant 0 : i32
    %183 = tpu.memref_slice %arg4[%c0_i32_145, %c0_i32_146] : memref<128x128xf32, #tpu.memory_space<any>> -> memref<1x128xf32, #tpu.memory_space<any>>
    %c13_i32_147 = arith.constant 13 : i32
    %c0_i32_148 = arith.constant 0 : i32
    %184 = tpu.memref_slice %arg11[%c13_i32_147, %c0_i32_148] : memref<16x128xf32, #tpu.memory_space<vmem>> -> memref<1x128xf32, #tpu.memory_space<vmem>>
    %185 = tpu.memref_slice %arg12[%c13_i32_144] : memref<16x!tpu.dma_semaphore, #tpu.memory_space<semaphore_mem>> -> memref<1x!tpu.dma_semaphore, #tpu.memory_space<semaphore_mem>>
    %186 = tpu.memref_squeeze %185 : memref<1x!tpu.dma_semaphore, #tpu.memory_space<semaphore_mem>> -> memref<!tpu.dma_semaphore, #tpu.memory_space<semaphore_mem>>
    tpu.wait_dma2 semaphore(%186 : memref<!tpu.dma_semaphore, #tpu.memory_space<semaphore_mem>>) src(%183 : memref<1x128xf32, #tpu.memory_space<any>>) dst(%184 : memref<1x128xf32, #tpu.memory_space<vmem>>)
    %c14_i32_149 = arith.constant 14 : i32
    %c0_i32_150 = arith.constant 0 : i32
    %c0_i32_151 = arith.constant 0 : i32
    %187 = tpu.memref_slice %arg4[%c0_i32_150, %c0_i32_151] : memref<128x128xf32, #tpu.memory_space<any>> -> memref<1x128xf32, #tpu.memory_space<any>>
    %c14_i32_152 = arith.constant 14 : i32
    %c0_i32_153 = arith.constant 0 : i32
    %188 = tpu.memref_slice %arg11[%c14_i32_152, %c0_i32_153] : memref<16x128xf32, #tpu.memory_space<vmem>> -> memref<1x128xf32, #tpu.memory_space<vmem>>
    %189 = tpu.memref_slice %arg12[%c14_i32_149] : memref<16x!tpu.dma_semaphore, #tpu.memory_space<semaphore_mem>> -> memref<1x!tpu.dma_semaphore, #tpu.memory_space<semaphore_mem>>
    %190 = tpu.memref_squeeze %189 : memref<1x!tpu.dma_semaphore, #tpu.memory_space<semaphore_mem>> -> memref<!tpu.dma_semaphore, #tpu.memory_space<semaphore_mem>>
    tpu.wait_dma2 semaphore(%190 : memref<!tpu.dma_semaphore, #tpu.memory_space<semaphore_mem>>) src(%187 : memref<1x128xf32, #tpu.memory_space<any>>) dst(%188 : memref<1x128xf32, #tpu.memory_space<vmem>>)
    %c15_i32_154 = arith.constant 15 : i32
    %c0_i32_155 = arith.constant 0 : i32
    %c0_i32_156 = arith.constant 0 : i32
    %191 = tpu.memref_slice %arg4[%c0_i32_155, %c0_i32_156] : memref<128x128xf32, #tpu.memory_space<any>> -> memref<1x128xf32, #tpu.memory_space<any>>
    %c15_i32_157 = arith.constant 15 : i32
    %c0_i32_158 = arith.constant 0 : i32
    %192 = tpu.memref_slice %arg11[%c15_i32_157, %c0_i32_158] : memref<16x128xf32, #tpu.memory_space<vmem>> -> memref<1x128xf32, #tpu.memory_space<vmem>>
    %193 = tpu.memref_slice %arg12[%c15_i32_154] : memref<16x!tpu.dma_semaphore, #tpu.memory_space<semaphore_mem>> -> memref<1x!tpu.dma_semaphore, #tpu.memory_space<semaphore_mem>>
    %194 = tpu.memref_squeeze %193 : memref<1x!tpu.dma_semaphore, #tpu.memory_space<semaphore_mem>> -> memref<!tpu.dma_semaphore, #tpu.memory_space<semaphore_mem>>
    tpu.wait_dma2 semaphore(%194 : memref<!tpu.dma_semaphore, #tpu.memory_space<semaphore_mem>>) src(%191 : memref<1x128xf32, #tpu.memory_space<any>>) dst(%192 : memref<1x128xf32, #tpu.memory_space<vmem>>)
    %c0_159 = arith.constant 0 : index
    %195 = memref.load %arg1[%c0_159] : memref<1xi32, #tpu.memory_space<smem>>
    %c0_i32_160 = arith.constant 0 : i32
    %196 = arith.addi %c0_i32_160, %195 : i32
    %c0_i32_161 = arith.constant 0 : i32
    %197 = arith.addi %196, %c0_i32_161 : i32
    %198 = arith.cmpi sge, %197, %0 : i32
    %c16_i32_162 = arith.constant 16 : i32
    %199 = arith.addi %0, %c16_i32_162 : i32
    %200 = arith.cmpi slt, %197, %199 : i32
    %201 = arith.andi %198, %200 : i1
    %202 = arith.extui %201 : i1 to i32
    %c0_i32_163 = arith.constant 0 : i32
    %203 = arith.cmpi ne, %202, %c0_i32_163 : i32
    scf.if %203 {
      %228 = vector.extract_strided_slice %130 {offsets = [0, 0], sizes = [1, 128], strides = [1, 1]} : vector<2x256xf32> to vector<1x128xf32>
      %229 = arith.subi %197, %0 : i32
      %230 = arith.index_cast %229 : i32 to index
      %c0_176 = arith.constant 0 : index
      %231 = vector.load %arg11[%230, %c0_176] : memref<16x128xf32, #tpu.memory_space<vmem>>, vector<1x128xf32>
      tpu.vector_store %arg11[%230, %c0_176], %228 {strides = array<i32>} : memref<16x128xf32, #tpu.memory_space<vmem>>, vector<1x128xf32>,
    } else {
    }
    %c0_i32_164 = arith.constant 0 : i32
    %204 = arith.addi %c0_i32_164, %195 : i32
    %c1_i32_165 = arith.constant 1 : i32
    %205 = arith.addi %204, %c1_i32_165 : i32
    %206 = arith.cmpi sge, %205, %0 : i32
    %c16_i32_166 = arith.constant 16 : i32
    %207 = arith.addi %0, %c16_i32_166 : i32
    %208 = arith.cmpi slt, %205, %207 : i32
    %209 = arith.andi %206, %208 : i1
    %210 = arith.extui %209 : i1 to i32
    %c0_i32_167 = arith.constant 0 : i32
    %211 = arith.cmpi ne, %210, %c0_i32_167 : i32
    scf.if %211 {
      %228 = vector.extract_strided_slice %130 {offsets = [0, 128], sizes = [1, 128], strides = [1, 1]} : vector<2x256xf32> to vector<1x128xf32>
      %229 = arith.subi %205, %0 : i32
      %230 = arith.index_cast %229 : i32 to index
      %c0_176 = arith.constant 0 : index
      %231 = vector.load %arg11[%230, %c0_176] : memref<16x128xf32, #tpu.memory_space<vmem>>, vector<1x128xf32>
      tpu.vector_store %arg11[%230, %c0_176], %228 {strides = array<i32>} : memref<16x128xf32, #tpu.memory_space<vmem>>, vector<1x128xf32>,
    } else {
    }
    %c16_i32_168 = arith.constant 16 : i32
    %212 = arith.addi %c16_i32_168, %195 : i32
    %c0_i32_169 = arith.constant 0 : i32
    %213 = arith.addi %212, %c0_i32_169 : i32
    %214 = arith.cmpi sge, %213, %0 : i32
    %c16_i32_170 = arith.constant 16 : i32
    %215 = arith.addi %0, %c16_i32_170 : i32
    %216 = arith.cmpi slt, %213, %215 : i32
    %217 = arith.andi %214, %216 : i1
    %218 = arith.extui %217 : i1 to i32
    %c0_i32_171 = arith.constant 0 : i32
    %219 = arith.cmpi ne, %218, %c0_i32_171 : i32
    scf.if %219 {
      %228 = vector.extract_strided_slice %130 {offsets = [1, 0], sizes = [1, 128], strides = [1, 1]} : vector<2x256xf32> to vector<1x128xf32>
      %229 = arith.subi %213, %0 : i32
      %230 = arith.index_cast %229 : i32 to index
      %c0_176 = arith.constant 0 : index
      %231 = vector.load %arg11[%230, %c0_176] : memref<16x128xf32, #tpu.memory_space<vmem>>, vector<1x128xf32>
      tpu.vector_store %arg11[%230, %c0_176], %228 {strides = array<i32>} : memref<16x128xf32, #tpu.memory_space<vmem>>, vector<1x128xf32>,
    } else {
    }
    %c16_i32_172 = arith.constant 16 : i32
    %220 = arith.addi %c16_i32_172, %195 : i32
    %c1_i32_173 = arith.constant 1 : i32
    %221 = arith.addi %220, %c1_i32_173 : i32
    %222 = arith.cmpi sge, %221, %0 : i32
    %c16_i32_174 = arith.constant 16 : i32
    %223 = arith.addi %0, %c16_i32_174 : i32
    %224 = arith.cmpi slt, %221, %223 : i32
    %225 = arith.andi %222, %224 : i1
    %226 = arith.extui %225 : i1 to i32
    %c0_i32_175 = arith.constant 0 : i32
    %227 = arith.cmpi ne, %226, %c0_i32_175 : i32
    scf.if %227 {
      %228 = vector.extract_strided_slice %130 {offsets = [1, 128], sizes = [1, 128], strides = [1, 1]} : vector<2x256xf32> to vector<1x128xf32>
      %229 = arith.subi %221, %0 : i32
      %230 = arith.index_cast %229 : i32 to index
      %c0_176 = arith.constant 0 : index
      %231 = vector.load %arg11[%230, %c0_176] : memref<16x128xf32, #tpu.memory_space<vmem>>, vector<1x128xf32>
      tpu.vector_store %arg11[%230, %c0_176], %228 {strides = array<i32>} : memref<16x128xf32, #tpu.memory_space<vmem>>, vector<1x128xf32>,
    } else {
    }
    return
  }
  func.func @transform_0(%arg0: i32, %arg1: memref<1xi32, #tpu.memory_space<smem>>, %arg2: memref<32xi32, #tpu.memory_space<smem>>) -> (i32, i32) {
    %c0_i32 = arith.constant 0 : i32
    %c0_i32_0 = arith.constant 0 : i32
    %c0_i32_1 = arith.constant 0 : i32
    return %c0_i32, %c0_i32_0 : i32, i32
  }
  func.func @transform_2(%arg0: i32, %arg1: memref<1xi32, #tpu.memory_space<smem>>, %arg2: memref<32xi32, #tpu.memory_space<smem>>) -> (i32, i32) {
    %c0_i32 = arith.constant 0 : i32
    %c0_i32_0 = arith.constant 0 : i32
    %c0_i32_1 = arith.constant 0 : i32
    return %c0_i32, %c0_i32_0 : i32, i32
  }
  func.func @transform_3(%arg0: i32, %arg1: memref<1xi32, #tpu.memory_space<smem>>, %arg2: memref<32xi32, #tpu.memory_space<smem>>) -> (i32, i32) {
    %c0_i32 = arith.constant 0 : i32
    %c0_i32_0 = arith.constant 0 : i32
    %c0_i32_1 = arith.constant 0 : i32
    return %c0_i32, %c0_i32_0 : i32, i32
  }
  func.func @transform_4(%arg0: i32, %arg1: memref<1xi32, #tpu.memory_space<smem>>, %arg2: memref<32xi32, #tpu.memory_space<smem>>) -> (i32, i32) {
    %c0_i32 = arith.constant 0 : i32
    %c0_i32_0 = arith.constant 0 : i32
    %c0_i32_1 = arith.constant 0 : i32
    return %c0_i32, %c0_i32_0 : i32, i32
  }
  func.func @transform_5(%arg0: i32, %arg1: memref<1xi32, #tpu.memory_space<smem>>, %arg2: memref<32xi32, #tpu.memory_space<smem>>) -> (i32, i32) {
    %c0_i32 = arith.constant 0 : i32
    %c0_i32_0 = arith.constant 0 : i32
    %c0_i32_1 = arith.constant 0 : i32
    return %c0_i32, %c0_i32_0 : i32, i32
  }
  func.func @transform_6(%arg0: i32, %arg1: memref<1xi32, #tpu.memory_space<smem>>, %arg2: memref<32xi32, #tpu.memory_space<smem>>) -> (i32, i32) {
    %c0_i32 = arith.constant 0 : i32
    %c0_i32_0 = arith.constant 0 : i32
    %c0_i32_1 = arith.constant 0 : i32
    return %c0_i32, %c0_i32_0 : i32, i32
  }
  func.func @transform_7(%arg0: i32, %arg1: memref<1xi32, #tpu.memory_space<smem>>, %arg2: memref<32xi32, #tpu.memory_space<smem>>) -> (i32, i32) {
    %c0_i32 = arith.constant 0 : i32
    %c0_i32_0 = arith.constant 0 : i32
    %c0_i32_1 = arith.constant 0 : i32
    return %c0_i32, %c0_i32_0 : i32, i32
  }
  func.func @transform_8(%arg0: i32, %arg1: memref<1xi32, #tpu.memory_space<smem>>, %arg2: memref<32xi32, #tpu.memory_space<smem>>) -> (i32, i32) {
    %c0_i32 = arith.constant 0 : i32
    %c0_i32_0 = arith.constant 0 : i32
    return %arg0, %c0_i32 : i32, i32
  }
}

</mosaic_0001>

<llo_original>
// kernel: tpu_custom_call.1
$region0: #{tpu_custom_call.1}
  #allocation0 [shape = 'u32[]', space=smem, size = 0x4, offset = 0x4, fixed_abs, tag = 'smem constant byte address 0x4 - core index']
  #allocation1 [shape = 'u32[72,128]{1,0:T(1,128)}', space=vmem, size = 0x9000, scoped, tag = 'internal scratch']
  #allocation2 [shape = 's32[16]{0}', space=sflag, size = 0x40, scoped, tag = 'scratch operand']
  #allocation3 [shape = 's32[1]{0}', space=sflag, size = 0x4, scoped, tag = 'scoped memory for tpu_custom_call.1']
  #allocation4 [shape = 's32[1]{0:T(128)S(6)}', space=smem, size = 0x200, scoped, tag = 'prefetched SMEM operand 0']
  #allocation5 [shape = 'u8[512]{0}', space=smem, size = 0x200, scoped, tag = 'prefetched SMEM operand 1']
  #allocation10 [shape = 's32[]', space=sflag, size = 0x4, offset = 0, fixed_abs, tag = 'sflag constant byte address 0x0 - dummy sync flag']
  #allocation11 [shape = 's32[]', space=sflag, size = 0x4, offset = 0, fixed_abs, tag = 'sflag constant byte address 0x0 - dummy sync flag']
  #allocation12 [shape = 'u32[]', space=smem, size = 0x4, offset = 0x44, fixed_abs, tag = 'smem constant byte address 0x44 - assertion arg 0']
  #allocation13 [shape = 'u32[]', space=smem, size = 0x4, offset = 0x48, fixed_abs, tag = 'smem constant byte address 0x48 - assertion arg 1']
  #allocation14 [shape = 's32[]', space=sflag, size = 0x4, offset = 0, fixed_abs, tag = 'sflag constant byte address 0x0 - dummy sync flag']
  #allocation15 [shape = 's32[]', space=sflag, size = 0x4, offset = 0, fixed_abs, tag = 'sflag constant byte address 0x0 - dummy sync flag']
  #allocation16 [shape = 's32[]', space=sflag, size = 0x4, offset = 0, fixed_abs, tag = 'sflag constant byte address 0x0 - dummy sync flag']
  #allocation17 [shape = 's32[]', space=sflag, size = 0x4, offset = 0, fixed_abs, tag = 'sflag constant byte address 0x0 - dummy sync flag']
  #allocation18 [shape = 's32[]', space=sflag, size = 0x4, offset = 0, fixed_abs, tag = 'sflag constant byte address 0x0 - dummy sync flag']
  #allocation19 [shape = 's32[]', space=sflag, size = 0x4, offset = 0, fixed_abs, tag = 'sflag constant byte address 0x0 - dummy sync flag']
  #allocation20 [shape = 's32[]', space=sflag, size = 0x4, offset = 0, fixed_abs, tag = 'sflag constant byte address 0x0 - dummy sync flag']
  #allocation21 [shape = 's32[]', space=sflag, size = 0x4, offset = 0, fixed_abs, tag = 'sflag constant byte address 0x0 - dummy sync flag']
  #allocation22 [shape = 's32[]', space=sflag, size = 0x4, offset = 0, fixed_abs, tag = 'sflag constant byte address 0x0 - dummy sync flag']
  #allocation23 [shape = 's32[]', space=sflag, size = 0x4, offset = 0, fixed_abs, tag = 'sflag constant byte address 0x0 - dummy sync flag']
  #allocation24 [shape = 's32[]', space=sflag, size = 0x4, offset = 0, fixed_abs, tag = 'sflag constant byte address 0x0 - dummy sync flag']
  #allocation25 [shape = 's32[]', space=sflag, size = 0x4, offset = 0, fixed_abs, tag = 'sflag constant byte address 0x0 - dummy sync flag']
  #allocation26 [shape = 's32[]', space=sflag, size = 0x4, offset = 0, fixed_abs, tag = 'sflag constant byte address 0x0 - dummy sync flag']
  #allocation27 [shape = 's32[]', space=sflag, size = 0x4, offset = 0, fixed_abs, tag = 'sflag constant byte address 0x0 - dummy sync flag']
  #allocation28 [shape = 's32[]', space=sflag, size = 0x4, offset = 0, fixed_abs, tag = 'sflag constant byte address 0x0 - dummy sync flag']
  #allocation29 [shape = 's32[]', space=sflag, size = 0x4, offset = 0, fixed_abs, tag = 'sflag constant byte address 0x0 - dummy sync flag']
  #allocation30 [shape = 's32[]', space=sflag, size = 0x4, offset = 0, fixed_abs, tag = 'sflag constant byte address 0x0 - dummy sync flag']
  #allocation31 [shape = 's32[]', space=sflag, size = 0x4, offset = 0, fixed_abs, tag = 'sflag constant byte address 0x0 - dummy sync flag']
  #allocation32 [shape = 's32[]', space=sflag, size = 0x4, offset = 0, fixed_abs, tag = 'sflag constant byte address 0x0 - dummy sync flag']
  #allocation33 [shape = 's32[]', space=sflag, size = 0x4, offset = 0, fixed_abs, tag = 'sflag constant byte address 0x0 - dummy sync flag']
  #allocation34 [shape = 's32[]', space=sflag, size = 0x4, offset = 0, fixed_abs, tag = 'sflag constant byte address 0x0 - dummy sync flag']
  #allocation35 [shape = 's32[]', space=sflag, size = 0x4, offset = 0, fixed_abs, tag = 'sflag constant byte address 0x0 - dummy sync flag']
  #allocation36 [shape = 's32[]', space=sflag, size = 0x4, offset = 0, fixed_abs, tag = 'sflag constant byte address 0x0 - dummy sync flag']
  #allocation37 [shape = 's32[]', space=sflag, size = 0x4, offset = 0, fixed_abs, tag = 'sflag constant byte address 0x0 - dummy sync flag']
  #allocation38 [shape = 's32[]', space=sflag, size = 0x4, offset = 0, fixed_abs, tag = 'sflag constant byte address 0x0 - dummy sync flag']
  #allocation39 [shape = 's32[]', space=sflag, size = 0x4, offset = 0, fixed_abs, tag = 'sflag constant byte address 0x0 - dummy sync flag']
  #allocation40 [shape = 's32[]', space=sflag, size = 0x4, offset = 0, fixed_abs, tag = 'sflag constant byte address 0x0 - dummy sync flag']
  #allocation41 [shape = 's32[]', space=sflag, size = 0x4, offset = 0, fixed_abs, tag = 'sflag constant byte address 0x0 - dummy sync flag']
  #allocation42 [shape = 's32[]', space=sflag, size = 0x4, offset = 0, fixed_abs, tag = 'sflag constant byte address 0x0 - dummy sync flag']
  #allocation43 [shape = 's32[]', space=sflag, size = 0x4, offset = 0, fixed_abs, tag = 'sflag constant byte address 0x0 - dummy sync flag']
  %s0 = inlined_call_operand.<no memory space> [shape: s32[1], index: 0, kind: input, shape index: {}]
  %s1 = inlined_call_operand.vmem [shape: s32[32], index: 1, kind: input, shape index: {}]
  %s2 = inlined_call_operand.vmem [shape: f32[2,64], index: 2, kind: input, shape index: {}]
  %s3 = inlined_call_operand.hbm [shape: f32[128,128], index: 3, kind: input, shape index: {}]
  %s4 = inlined_call_operand.vmem [shape: f32[64,32], index: 4, kind: input, shape index: {}]
  %s5 = inlined_call_operand.vmem [shape: f32[1,32], index: 5, kind: input, shape index: {}]
  %s6 = inlined_call_operand.vmem [shape: f32[32,64], index: 6, kind: input, shape index: {}]
  %s7 = inlined_call_operand.vmem [shape: f32[1,64], index: 7, kind: input, shape index: {}]
  %s8 = inlined_call_operand.hbm [shape: f32[64,256], index: 8, kind: input, shape index: {}]
  %s9 = inlined_call_operand.vmem [shape: f32[1,256], index: 9, kind: input, shape index: {}]
  %s10 = inlined_call_operand.hbm [shape: f32[32,128], index: 10, kind: output, shape index: {}]
  %s11 = sld [smem:[#allocation0]]
  $region145: #{tpu_custom_call.1} parent=0
    _
  %s13 = ssub.s32 1, %s11
  %s14 = scalar_select 0, %s13, %s11
  %15 = sst [smem:[#allocation4]] %s0
  %s17 = sshll.u32 %s1, 4
  %s18 = int_to_ptr.vmem [resolvable:$true] %s17
  %20 = dma.vmem_to_smem %s18, 16, [#allocation5], [#allocation3]
  %22 = dma.done [#allocation3], 16
  %23 = sfence
  $region1: #{tpu_custom_call.1} parent=0
    #allocation6 [shape = 'u8[65536]{0}', space=vmem, size = 0x10000, scoped, tag = 'input window, operand 8, single buffered']
    #allocation7 [shape = 's32[2]{0}', space=sflag, size = 0x8, scoped, tag = 'scoped memory for tpu_custom_call.1']
    #allocation8 [shape = 's32[2]{0}', space=sflag, size = 0x8, scoped, tag = 'scoped memory for tpu_custom_call.1']
    #allocation9 [shape = 'u8[16384]{0}', space=vmem, size = 0x4000, scoped, tag = 'output window, operand 0']
    %24 = vsyncpa [#allocation7], 0
    %25 = vsyncpa [#allocation8], 0
    %s26 = scalar_lea.sflag [#allocation8], 1
    %27 = vsyncpa %s26, 0
    loop: start=0, step=1, limit=4
    $region2: #{tpu_custom_call.1} parent=1 // loop_pre_header
      _
    $region3: #{tpu_custom_call.1} parent=1 // loop_header
      %s29 = sphi 0, %s33
      %p30 = scmp.ge.s32.totalorder %s29, 4
      %s37 = sphi 0, %s37
      %s39 = sphi 0, %s37
      %s40 = sphi 0, %s39
      %s54 = sphi 0, %s40
      %s58 = sphi 0, %s58
      %s60 = sphi 0, %s58
      %s61 = sphi 0, %s60
      %s75 = sphi 0, %s61
      %s79 = sphi 0, %s79
      %s81 = sphi 0, %s79
      %s82 = sphi 0, %s81
      %s96 = sphi 0, %s82
      %s100 = sphi 0, %s100
      %s102 = sphi 0, %s100
      %s103 = sphi 0, %s102
      %s117 = sphi 0, %s103
      %s121 = sphi 0, %s121
      %s123 = sphi 0, %s121
      %s124 = sphi 0, %s123
      %s138 = sphi 0, %s124
      %s142 = sphi 0, %s142
      %s144 = sphi 0, %s142
      %s145 = sphi 0, %s144
      %s159 = sphi 0, %s145
      %s163 = sphi 0, %s163
      %s165 = sphi 0, %s163
      %s166 = sphi 0, %s165
      %s180 = sphi 0, %s166
      %s186 = sphi 0, %s188
      %s189 = sphi 0, %s186
      %s190 = sphi 0, %s189
      %s206 = sphi 0, %s190
    $region4: #{tpu_custom_call.1} parent=1 // loop_header_branch
      %32 = sbr.rel (%p30) target = $region8
    $region5: #{tpu_custom_call.1} parent=1 // loop_body
      %s34 = ssub.s32 %s29, 1
      %s35 = ssub.s32 %s29, 2
      %s36 = sadd.s32 %s29, 1
      %s38 = sadd.s32 %s37, 1
      %p41 = scmp.eq.s32.totalorder %s29, 1
      %p42 = scmp.ne.s32.totalorder %s37, %s39
      %p43 = scmp.eq.s32.totalorder %s29, 0
      %p44 = por %p42, %p43
      %p45 = scmp.ne.s32.totalorder %s37, %s39
      %p46 = scmp.eq.s32.totalorder %s34, 1
      %p47 = por %p45, %p46
      %p48 = scmp.ne.s32.totalorder %s39, %s40
      %p49 = scmp.eq.s32.totalorder %s34, 0
      %p50 = por %p48, %p49
      %p51 = scmp.ne.s32.totalorder %s39, %s40
      %p52 = scmp.eq.s32.totalorder %s35, 1
      %p53 = por %p51, %p52
      %p55 = scmp.ne.s32.totalorder %s40, %s54
      %p56 = scmp.eq.s32.totalorder %s35, 0
      %p57 = por %p55, %p56
      %s59 = sadd.s32 %s58, 1
      %p62 = scmp.eq.s32.totalorder %s29, 1
      %p63 = scmp.ne.s32.totalorder %s58, %s60
      %p64 = scmp.eq.s32.totalorder %s29, 0
      %p65 = por %p63, %p64
      %p66 = scmp.ne.s32.totalorder %s58, %s60
      %p67 = scmp.eq.s32.totalorder %s34, 1
      %p68 = por %p66, %p67
      %p69 = scmp.ne.s32.totalorder %s60, %s61
      %p70 = scmp.eq.s32.totalorder %s34, 0
      %p71 = por %p69, %p70
      %p72 = scmp.ne.s32.totalorder %s60, %s61
      %p73 = scmp.eq.s32.totalorder %s35, 1
      %p74 = por %p72, %p73
      %p76 = scmp.ne.s32.totalorder %s61, %s75
      %p77 = scmp.eq.s32.totalorder %s35, 0
      %p78 = por %p76, %p77
      %s80 = sadd.s32 %s79, 1
      %p83 = scmp.eq.s32.totalorder %s29, 1
      %p84 = scmp.ne.s32.totalorder %s79, %s81
      %p85 = scmp.eq.s32.totalorder %s29, 0
      %p86 = por %p84, %p85
      %p87 = scmp.ne.s32.totalorder %s79, %s81
      %p88 = scmp.eq.s32.totalorder %s34, 1
      %p89 = por %p87, %p88
      %p90 = scmp.ne.s32.totalorder %s81, %s82
      %p91 = scmp.eq.s32.totalorder %s34, 0
      %p92 = por %p90, %p91
      %p93 = scmp.ne.s32.totalorder %s81, %s82
      %p94 = scmp.eq.s32.totalorder %s35, 1
      %p95 = por %p93, %p94
      %p97 = scmp.ne.s32.totalorder %s82, %s96
      %p98 = scmp.eq.s32.totalorder %s35, 0
      %p99 = por %p97, %p98
      %s101 = sadd.s32 %s100, 1
      %p104 = scmp.eq.s32.totalorder %s29, 1
      %p105 = scmp.ne.s32.totalorder %s100, %s102
      %p106 = scmp.eq.s32.totalorder %s29, 0
      %p107 = por %p105, %p106
      %p108 = scmp.ne.s32.totalorder %s100, %s102
      %p109 = scmp.eq.s32.totalorder %s34, 1
      %p110 = por %p108, %p109
      %p111 = scmp.ne.s32.totalorder %s102, %s103
      %p112 = scmp.eq.s32.totalorder %s34, 0
      %p113 = por %p111, %p112
      %p114 = scmp.ne.s32.totalorder %s102, %s103
      %p115 = scmp.eq.s32.totalorder %s35, 1
      %p116 = por %p114, %p115
      %p118 = scmp.ne.s32.totalorder %s103, %s117
      %p119 = scmp.eq.s32.totalorder %s35, 0
      %p120 = por %p118, %p119
      %s122 = sadd.s32 %s121, 1
      %p125 = scmp.eq.s32.totalorder %s29, 1
      %p126 = scmp.ne.s32.totalorder %s121, %s123
      %p127 = scmp.eq.s32.totalorder %s29, 0
      %p128 = por %p126, %p127
      %p129 = scmp.ne.s32.totalorder %s121, %s123
      %p130 = scmp.eq.s32.totalorder %s34, 1
      %p131 = por %p129, %p130
      %p132 = scmp.ne.s32.totalorder %s123, %s124
      %p133 = scmp.eq.s32.totalorder %s34, 0
      %p134 = por %p132, %p133
      %p135 = scmp.ne.s32.totalorder %s123, %s124
      %p136 = scmp.eq.s32.totalorder %s35, 1
      %p137 = por %p135, %p136
      %p139 = scmp.ne.s32.totalorder %s124, %s138
      %p140 = scmp.eq.s32.totalorder %s35, 0
      %p141 = por %p139, %p140
      %s143 = sadd.s32 %s142, 1
      %p146 = scmp.eq.s32.totalorder %s29, 1
      %p147 = scmp.ne.s32.totalorder %s142, %s144
      %p148 = scmp.eq.s32.totalorder %s29, 0
      %p149 = por %p147, %p148
      %p150 = scmp.ne.s32.totalorder %s142, %s144
      %p151 = scmp.eq.s32.totalorder %s34, 1
      %p152 = por %p150, %p151
      %p153 = scmp.ne.s32.totalorder %s144, %s145
      %p154 = scmp.eq.s32.totalorder %s34, 0
      %p155 = por %p153, %p154
      %p156 = scmp.ne.s32.totalorder %s144, %s145
      %p157 = scmp.eq.s32.totalorder %s35, 1
      %p158 = por %p156, %p157
      %p160 = scmp.ne.s32.totalorder %s145, %s159
      %p161 = scmp.eq.s32.totalorder %s35, 0
      %p162 = por %p160, %p161
      %s164 = sadd.s32 %s163, 1
      %p167 = scmp.eq.s32.totalorder %s29, 1
      %p168 = scmp.ne.s32.totalorder %s163, %s165
      %p169 = scmp.eq.s32.totalorder %s29, 0
      %p170 = por %p168, %p169
      %p171 = scmp.ne.s32.totalorder %s163, %s165
      %p172 = scmp.eq.s32.totalorder %s34, 1
      %p173 = por %p171, %p172
      %p174 = scmp.ne.s32.totalorder %s165, %s166
      %p175 = scmp.eq.s32.totalorder %s34, 0
      %p176 = por %p174, %p175
      %p177 = scmp.ne.s32.totalorder %s165, %s166
      %p178 = scmp.eq.s32.totalorder %s35, 1
      %p179 = por %p177, %p178
      %p181 = scmp.ne.s32.totalorder %s166, %s180
      %p182 = scmp.eq.s32.totalorder %s35, 0
      %p183 = por %p181, %p182
      %s184 = ssub.s32 %s29, %s36
      %p185 = scmp.eq.s32.totalorder %s184, 0
      %s187 = sadd.s32 %s186, 1
      %s188 = scalar_select %p185, %s186, %s187
      %p191 = pneg %p185
      %p192 = scmp.eq.s32.totalorder %s29, 1
      %p193 = por %p191, %p192
      %p194 = scmp.ne.s32.totalorder %s186, %s189
      %p195 = scmp.eq.s32.totalorder %s29, 0
      %p196 = por %p194, %p195
      %p197 = scmp.ne.s32.totalorder %s186, %s189
      %p198 = scmp.eq.s32.totalorder %s34, 1
      %p199 = por %p197, %p198
      %p200 = scmp.ne.s32.totalorder %s189, %s190
      %p201 = scmp.eq.s32.totalorder %s34, 0
      %p202 = por %p200, %p201
      %p203 = scmp.ne.s32.totalorder %s189, %s190
      %p204 = scmp.eq.s32.totalorder %s35, 1
      %p205 = por %p203, %p204
      %p207 = scmp.ne.s32.totalorder %s190, %s206
      %p208 = scmp.eq.s32.totalorder %s35, 0
      %p209 = por %p207, %p208
      %p210 = scmp.le.s32.totalorder 1, %s29
      %p211 = scmp.lt.s32.totalorder %s29, 3
      %p212 = pnand %p210, %p211
      %p213 = pneg %p212
      // Predicated region
      $region9: #{tpu_custom_call.1} parent=5 // pred_check
        _
      $region10: #{tpu_custom_call.1} parent=5 // pred_check_branch
        %215 = sbr.rel (%p212) target = $region12
      $region11: #{tpu_custom_call.1} parent=5 // pred_region
        %s216 = ssub.s32 %s29, 1
        // Predicated region
        $region13: #{tpu_custom_call.1} parent=11 // pred_check
          %p217 = pneg %p50
        $region14: #{tpu_custom_call.1} parent=11 // pred_check_branch
          %219 = sbr.rel (%p217) target = $region16
        $region15: #{tpu_custom_call.1} parent=11 // pred_region
          _
        $region16: #{tpu_custom_call.1} parent=11 // pred_fallthru
          _
        // Predicated region
        $region17: #{tpu_custom_call.1} parent=11 // pred_check
          %p220 = pneg %p71
        $region18: #{tpu_custom_call.1} parent=11 // pred_check_branch
          %222 = sbr.rel (%p220) target = $region20
        $region19: #{tpu_custom_call.1} parent=11 // pred_region
          _
        $region20: #{tpu_custom_call.1} parent=11 // pred_fallthru
          _
        // Predicated region
        $region21: #{tpu_custom_call.1} parent=11 // pred_check
          %p223 = pneg %p92
        $region22: #{tpu_custom_call.1} parent=11 // pred_check_branch
          %225 = sbr.rel (%p223) target = $region24
        $region23: #{tpu_custom_call.1} parent=11 // pred_region
          _
        $region24: #{tpu_custom_call.1} parent=11 // pred_fallthru
          _
        // Predicated region
        $region25: #{tpu_custom_call.1} parent=11 // pred_check
          %p226 = pneg %p113
        $region26: #{tpu_custom_call.1} parent=11 // pred_check_branch
          %228 = sbr.rel (%p226) target = $region28
        $region27: #{tpu_custom_call.1} parent=11 // pred_region
          _
        $region28: #{tpu_custom_call.1} parent=11 // pred_fallthru
          _
        // Predicated region
        $region29: #{tpu_custom_call.1} parent=11 // pred_check
          %p229 = pneg %p134
        $region30: #{tpu_custom_call.1} parent=11 // pred_check_branch
          %231 = sbr.rel (%p229) target = $region32
        $region31: #{tpu_custom_call.1} parent=11 // pred_region
          _
        $region32: #{tpu_custom_call.1} parent=11 // pred_fallthru
          _
        // Predicated region
        $region33: #{tpu_custom_call.1} parent=11 // pred_check
          %p232 = pneg %p155
        $region34: #{tpu_custom_call.1} parent=11 // pred_check_branch
          %234 = sbr.rel (%p232) target = $region36
        $region35: #{tpu_custom_call.1} parent=11 // pred_region
          %236 = vsyncadd [#allocation7], 0
          %s237 = sshll.u32 %s8, 4
          %s238 = int_to_ptr.hbm [resolvable:$true] %s237
          %s239 = sshll.u32 [#allocation6], 4
          %s240 = int_to_ptr.vmem [resolvable:$true] %s239
          %245 = dma.hbm_to_vmem [thread:$0]  %s238, 2048, %s240, [#allocation7], 256, 256, 16
        $region36: #{tpu_custom_call.1} parent=11 // pred_fallthru
          _
        // Predicated region
        $region37: #{tpu_custom_call.1} parent=11 // pred_check
          %p246 = pneg %p176
        $region38: #{tpu_custom_call.1} parent=11 // pred_check_branch
          %248 = sbr.rel (%p246) target = $region40
        $region39: #{tpu_custom_call.1} parent=11 // pred_region
          _
        $region40: #{tpu_custom_call.1} parent=11 // pred_fallthru
          _
      $region12: #{tpu_custom_call.1} parent=5 // pred_fallthru
        _
      %p249 = scmp.lt.s32.totalorder %s29, 2
      // Predicated region
      $region41: #{tpu_custom_call.1} parent=5 // pred_check
        %p250 = pneg %p249
      $region42: #{tpu_custom_call.1} parent=5 // pred_check_branch
        %252 = sbr.rel (%p250) target = $region44
      $region43: #{tpu_custom_call.1} parent=5 // pred_region
        _
      $region44: #{tpu_custom_call.1} parent=5 // pred_fallthru
        _
      %p253 = scmp.le.s32.totalorder 1, %s29
      %p254 = scmp.lt.s32.totalorder %s29, 3
      %p255 = pnand %p253, %p254
      %p256 = pneg %p255
      // Predicated region
      $region45: #{tpu_custom_call.1} parent=5 // pred_check
        _
      $region46: #{tpu_custom_call.1} parent=5 // pred_check_branch
        %258 = sbr.rel (%p255) target = $region48
      $region47: #{tpu_custom_call.1} parent=5 // pred_region
        %s259 = ssub.s32 %s29, 1
        // Predicated region
        $region49: #{tpu_custom_call.1} parent=47 // pred_check
          %p260 = pneg %p155
        $region50: #{tpu_custom_call.1} parent=47 // pred_check_branch
          %262 = sbr.rel (%p260) target = $region52
        $region51: #{tpu_custom_call.1} parent=47 // pred_region
          %264 = dma.done [#allocation7], 2048
        $region52: #{tpu_custom_call.1} parent=47 // pred_fallthru
          _
        %p265 = pneg %p50
        %p266 = pneg %p47
        %p267 = pneg %p71
        %p268 = pneg %p68
        %p269 = pneg %p92
        %p270 = pneg %p89
        %p271 = pneg %p113
        %p272 = pneg %p110
        %p273 = pneg %p134
        %p274 = pneg %p131
        %p275 = pneg %p155
        %p276 = pneg %p152
        %p277 = pneg %p176
        %p278 = pneg %p173
        %p279 = pneg %p202
        %p280 = pneg %p199
        %s281 = sand.u32 %s189, 1
        %s282 = scalar_lea.sflag [#allocation8], %s281
        %s283 = sand.u32 %s189, 1
        %s284 = smul.addr %s283, 16
        %s285 = scalar_lea.vmem [#allocation9], %s284
        %s286 = smul.u32 2, %s34
        %s287 = smul.u32 %s34, 16
        %s288 = sld [smem:[#allocation5 + %s287]]
        %s289 = scalar_lea.hbm %s3, %s288
        // Predicated region
        $region53: #{tpu_custom_call.1} parent=47 // pred_check
          _
        $region54: #{tpu_custom_call.1} parent=47 // pred_check_branch
          %291 = sbr.rel target = $region56
        $region55: #{tpu_custom_call.1} parent=47 // pred_region
          %292 = sst [smem:[#allocation12]] [#allocation11]
          %293 = sst [smem:[#allocation13]] [#allocation10]
        $region56: #{tpu_custom_call.1} parent=47 // pred_fallthru
          _
        %295 = shalt.err (0)
        %s297 = sshll.u32 %s289, 4
        %s298 = int_to_ptr.hbm [resolvable:$true] %s297
        %s299 = sshll.u32 %s285, 4
        %s300 = int_to_ptr.vmem [resolvable:$true] %s299
        %302 = dma.hbm_to_vmem [thread:$0]  %s298, 16, %s300, [#allocation2]
        %s303 = sadd.s32 %s287, 1
        %s304 = sld [smem:[#allocation5 + %s303]]
        %s305 = scalar_lea.hbm %s3, %s304
        %s306 = scalar_lea.vmem %s285, 1 [#allocation9]
        %s307 = scalar_lea.sflag [#allocation2], 1
        // Predicated region
        $region57: #{tpu_custom_call.1} parent=47 // pred_check
          _
        $region58: #{tpu_custom_call.1} parent=47 // pred_check_branch
          %309 = sbr.rel target = $region60
        $region59: #{tpu_custom_call.1} parent=47 // pred_region
          %310 = sst [smem:[#allocation12]] [#allocation15]
          %311 = sst [smem:[#allocation13]] [#allocation14]
        $region60: #{tpu_custom_call.1} parent=47 // pred_fallthru
          _
        %313 = shalt.err (0)
        %s315 = sshll.u32 %s305, 4
        %s316 = int_to_ptr.hbm [resolvable:$true] %s315
        %s317 = sshll.u32 %s306, 4
        %s318 = int_to_ptr.vmem [resolvable:$true] %s317
        %320 = dma.hbm_to_vmem [thread:$0]  %s316, 16, %s318, %s307
        %s321 = sadd.s32 %s287, 2
        %s322 = sld [smem:[#allocation5 + %s321]]
        %s323 = scalar_lea.hbm %s3, %s322
        %s324 = scalar_lea.vmem %s285, 2 [#allocation9]
        %s325 = scalar_lea.sflag [#allocation2], 2
        // Predicated region
        $region61: #{tpu_custom_call.1} parent=47 // pred_check
          _
        $region62: #{tpu_custom_call.1} parent=47 // pred_check_branch
          %327 = sbr.rel target = $region64
        $region63: #{tpu_custom_call.1} parent=47 // pred_region
          %328 = sst [smem:[#allocation12]] [#allocation17]
          %329 = sst [smem:[#allocation13]] [#allocation16]
        $region64: #{tpu_custom_call.1} parent=47 // pred_fallthru
          _
        %331 = shalt.err (0)
        %s333 = sshll.u32 %s323, 4
        %s334 = int_to_ptr.hbm [resolvable:$true] %s333
        %s335 = sshll.u32 %s324, 4
        %s336 = int_to_ptr.vmem [resolvable:$true] %s335
        %338 = dma.hbm_to_vmem [thread:$0]  %s334, 16, %s336, %s325
        %s339 = sadd.s32 %s287, 3
        %s340 = sld [smem:[#allocation5 + %s339]]
        %s341 = scalar_lea.hbm %s3, %s340
        %s342 = scalar_lea.vmem %s285, 3 [#allocation9]
        %s343 = scalar_lea.sflag [#allocation2], 3
        // Predicated region
        $region65: #{tpu_custom_call.1} parent=47 // pred_check
          _
        $region66: #{tpu_custom_call.1} parent=47 // pred_check_branch
          %345 = sbr.rel target = $region68
        $region67: #{tpu_custom_call.1} parent=47 // pred_region
          %346 = sst [smem:[#allocation12]] [#allocation19]
          %347 = sst [smem:[#allocation13]] [#allocation18]
        $region68: #{tpu_custom_call.1} parent=47 // pred_fallthru
          _
        %349 = shalt.err (0)
        %s351 = sshll.u32 %s341, 4
        %s352 = int_to_ptr.hbm [resolvable:$true] %s351
        %s353 = sshll.u32 %s342, 4
        %s354 = int_to_ptr.vmem [resolvable:$true] %s353
        %356 = dma.hbm_to_vmem [thread:$0]  %s352, 16, %s354, %s343
        %s357 = sadd.s32 %s287, 4
        %s358 = sld [smem:[#allocation5 + %s357]]
        %s359 = scalar_lea.hbm %s3, %s358
        %s360 = scalar_lea.vmem %s285, 4 [#allocation9]
        %s361 = scalar_lea.sflag [#allocation2], 4
        // Predicated region
        $region69: #{tpu_custom_call.1} parent=47 // pred_check
          _
        $region70: #{tpu_custom_call.1} parent=47 // pred_check_branch
          %363 = sbr.rel target = $region72
        $region71: #{tpu_custom_call.1} parent=47 // pred_region
          %364 = sst [smem:[#allocation12]] [#allocation21]
          %365 = sst [smem:[#allocation13]] [#allocation20]
        $region72: #{tpu_custom_call.1} parent=47 // pred_fallthru
          _
        %367 = shalt.err (0)
        %s369 = sshll.u32 %s359, 4
        %s370 = int_to_ptr.hbm [resolvable:$true] %s369
        %s371 = sshll.u32 %s360, 4
        %s372 = int_to_ptr.vmem [resolvable:$true] %s371
        %374 = dma.hbm_to_vmem [thread:$0]  %s370, 16, %s372, %s361
        %s375 = sadd.s32 %s287, 5
        %s376 = sld [smem:[#allocation5 + %s375]]
        %s377 = scalar_lea.hbm %s3, %s376
        %s378 = scalar_lea.vmem %s285, 5 [#allocation9]
        %s379 = scalar_lea.sflag [#allocation2], 5
        // Predicated region
        $region73: #{tpu_custom_call.1} parent=47 // pred_check
          _
        $region74: #{tpu_custom_call.1} parent=47 // pred_check_branch
          %381 = sbr.rel target = $region76
        $region75: #{tpu_custom_call.1} parent=47 // pred_region
          %382 = sst [smem:[#allocation12]] [#allocation23]
          %383 = sst [smem:[#allocation13]] [#allocation22]
        $region76: #{tpu_custom_call.1} parent=47 // pred_fallthru
          _
        %385 = shalt.err (0)
        %s387 = sshll.u32 %s377, 4
        %s388 = int_to_ptr.hbm [resolvable:$true] %s387
        %s389 = sshll.u32 %s378, 4
        %s390 = int_to_ptr.vmem [resolvable:$true] %s389
        %392 = dma.hbm_to_vmem [thread:$0]  %s388, 16, %s390, %s379
        %s393 = sadd.s32 %s287, 6
        %s394 = sld [smem:[#allocation5 + %s393]]
        %s395 = scalar_lea.hbm %s3, %s394
        %s396 = scalar_lea.vmem %s285, 6 [#allocation9]
        %s397 = scalar_lea.sflag [#allocation2], 6
        // Predicated region
        $region77: #{tpu_custom_call.1} parent=47 // pred_check
          _
        $region78: #{tpu_custom_call.1} parent=47 // pred_check_branch
          %399 = sbr.rel target = $region80
        $region79: #{tpu_custom_call.1} parent=47 // pred_region
          %400 = sst [smem:[#allocation12]] [#allocation25]
          %401 = sst [smem:[#allocation13]] [#allocation24]
        $region80: #{tpu_custom_call.1} parent=47 // pred_fallthru
          _
        %403 = shalt.err (0)
        %s405 = sshll.u32 %s395, 4
        %s406 = int_to_ptr.hbm [resolvable:$true] %s405
        %s407 = sshll.u32 %s396, 4
        %s408 = int_to_ptr.vmem [resolvable:$true] %s407
        %410 = dma.hbm_to_vmem [thread:$0]  %s406, 16, %s408, %s397
        %s411 = sadd.s32 %s287, 7
        %s412 = sld [smem:[#allocation5 + %s411]]
        %s413 = scalar_lea.hbm %s3, %s412
        %s414 = scalar_lea.vmem %s285, 7 [#allocation9]
        %s415 = scalar_lea.sflag [#allocation2], 7
        // Predicated region
        $region81: #{tpu_custom_call.1} parent=47 // pred_check
          _
        $region82: #{tpu_custom_call.1} parent=47 // pred_check_branch
          %417 = sbr.rel target = $region84
        $region83: #{tpu_custom_call.1} parent=47 // pred_region
          %418 = sst [smem:[#allocation12]] [#allocation27]
          %419 = sst [smem:[#allocation13]] [#allocation26]
        $region84: #{tpu_custom_call.1} parent=47 // pred_fallthru
          _
        %421 = shalt.err (0)
        %s423 = sshll.u32 %s413, 4
        %s424 = int_to_ptr.hbm [resolvable:$true] %s423
        %s425 = sshll.u32 %s414, 4
        %s426 = int_to_ptr.vmem [resolvable:$true] %s425
        %428 = dma.hbm_to_vmem [thread:$0]  %s424, 16, %s426, %s415
        %s429 = sadd.s32 %s287, 8
        %s430 = sld [smem:[#allocation5 + %s429]]
        %s431 = scalar_lea.hbm %s3, %s430
        %s432 = scalar_lea.vmem %s285, 8 [#allocation9]
        %s433 = scalar_lea.sflag [#allocation2], 8
        // Predicated region
        $region85: #{tpu_custom_call.1} parent=47 // pred_check
          _
        $region86: #{tpu_custom_call.1} parent=47 // pred_check_branch
          %435 = sbr.rel target = $region88
        $region87: #{tpu_custom_call.1} parent=47 // pred_region
          %436 = sst [smem:[#allocation12]] [#allocation29]
          %437 = sst [smem:[#allocation13]] [#allocation28]
        $region88: #{tpu_custom_call.1} parent=47 // pred_fallthru
          _
        %439 = shalt.err (0)
        %s441 = sshll.u32 %s431, 4
        %s442 = int_to_ptr.hbm [resolvable:$true] %s441
        %s443 = sshll.u32 %s432, 4
        %s444 = int_to_ptr.vmem [resolvable:$true] %s443
        %446 = dma.hbm_to_vmem [thread:$0]  %s442, 16, %s444, %s433
        %s447 = sadd.s32 %s287, 9
        %s448 = sld [smem:[#allocation5 + %s447]]
        %s449 = scalar_lea.hbm %s3, %s448
        %s450 = scalar_lea.vmem %s285, 9 [#allocation9]
        %s451 = scalar_lea.sflag [#allocation2], 9
        // Predicated region
        $region89: #{tpu_custom_call.1} parent=47 // pred_check
          _
        $region90: #{tpu_custom_call.1} parent=47 // pred_check_branch
          %453 = sbr.rel target = $region92
        $region91: #{tpu_custom_call.1} parent=47 // pred_region
          %454 = sst [smem:[#allocation12]] [#allocation31]
          %455 = sst [smem:[#allocation13]] [#allocation30]
        $region92: #{tpu_custom_call.1} parent=47 // pred_fallthru
          _
        %457 = shalt.err (0)
        %s459 = sshll.u32 %s449, 4
        %s460 = int_to_ptr.hbm [resolvable:$true] %s459
        %s461 = sshll.u32 %s450, 4
        %s462 = int_to_ptr.vmem [resolvable:$true] %s461
        %464 = dma.hbm_to_vmem [thread:$0]  %s460, 16, %s462, %s451
        %s465 = sadd.s32 %s287, 10
        %s466 = sld [smem:[#allocation5 + %s465]]
        %s467 = scalar_lea.hbm %s3, %s466
        %s468 = scalar_lea.vmem %s285, 10 [#allocation9]
        %s469 = scalar_lea.sflag [#allocation2], 10
        // Predicated region
        $region93: #{tpu_custom_call.1} parent=47 // pred_check
          _
        $region94: #{tpu_custom_call.1} parent=47 // pred_check_branch
          %471 = sbr.rel target = $region96
        $region95: #{tpu_custom_call.1} parent=47 // pred_region
          %472 = sst [smem:[#allocation12]] [#allocation33]
          %473 = sst [smem:[#allocation13]] [#allocation32]
        $region96: #{tpu_custom_call.1} parent=47 // pred_fallthru
          _
        %475 = shalt.err (0)
        %s477 = sshll.u32 %s467, 4
        %s478 = int_to_ptr.hbm [resolvable:$true] %s477
        %s479 = sshll.u32 %s468, 4
        %s480 = int_to_ptr.vmem [resolvable:$true] %s479
        %482 = dma.hbm_to_vmem [thread:$0]  %s478, 16, %s480, %s469
        %s483 = sadd.s32 %s287, 11
        %s484 = sld [smem:[#allocation5 + %s483]]
        %s485 = scalar_lea.hbm %s3, %s484
        %s486 = scalar_lea.vmem %s285, 11 [#allocation9]
        %s487 = scalar_lea.sflag [#allocation2], 11
        // Predicated region
        $region97: #{tpu_custom_call.1} parent=47 // pred_check
          _
        $region98: #{tpu_custom_call.1} parent=47 // pred_check_branch
          %489 = sbr.rel target = $region100
        $region99: #{tpu_custom_call.1} parent=47 // pred_region
          %490 = sst [smem:[#allocation12]] [#allocation35]
          %491 = sst [smem:[#allocation13]] [#allocation34]
        $region100: #{tpu_custom_call.1} parent=47 // pred_fallthru
          _
        %493 = shalt.err (0)
        %s495 = sshll.u32 %s485, 4
        %s496 = int_to_ptr.hbm [resolvable:$true] %s495
        %s497 = sshll.u32 %s486, 4
        %s498 = int_to_ptr.vmem [resolvable:$true] %s497
        %500 = dma.hbm_to_vmem [thread:$0]  %s496, 16, %s498, %s487
        %s501 = sadd.s32 %s287, 12
        %s502 = sld [smem:[#allocation5 + %s501]]
        %s503 = scalar_lea.hbm %s3, %s502
        %s504 = scalar_lea.vmem %s285, 12 [#allocation9]
        %s505 = scalar_lea.sflag [#allocation2], 12
        // Predicated region
        $region101: #{tpu_custom_call.1} parent=47 // pred_check
          _
        $region102: #{tpu_custom_call.1} parent=47 // pred_check_branch
          %507 = sbr.rel target = $region104
        $region103: #{tpu_custom_call.1} parent=47 // pred_region
          %508 = sst [smem:[#allocation12]] [#allocation37]
          %509 = sst [smem:[#allocation13]] [#allocation36]
        $region104: #{tpu_custom_call.1} parent=47 // pred_fallthru
          _
        %511 = shalt.err (0)
        %s513 = sshll.u32 %s503, 4
        %s514 = int_to_ptr.hbm [resolvable:$true] %s513
        %s515 = sshll.u32 %s504, 4
        %s516 = int_to_ptr.vmem [resolvable:$true] %s515
        %518 = dma.hbm_to_vmem [thread:$0]  %s514, 16, %s516, %s505
        %s519 = sadd.s32 %s287, 13
        %s520 = sld [smem:[#allocation5 + %s519]]
        %s521 = scalar_lea.hbm %s3, %s520
        %s522 = scalar_lea.vmem %s285, 13 [#allocation9]
        %s523 = scalar_lea.sflag [#allocation2], 13
        // Predicated region
        $region105: #{tpu_custom_call.1} parent=47 // pred_check
          _
        $region106: #{tpu_custom_call.1} parent=47 // pred_check_branch
          %525 = sbr.rel target = $region108
        $region107: #{tpu_custom_call.1} parent=47 // pred_region
          %526 = sst [smem:[#allocation12]] [#allocation39]
          %527 = sst [smem:[#allocation13]] [#allocation38]
        $region108: #{tpu_custom_call.1} parent=47 // pred_fallthru
          _
        %529 = shalt.err (0)
        %s531 = sshll.u32 %s521, 4
        %s532 = int_to_ptr.hbm [resolvable:$true] %s531
        %s533 = sshll.u32 %s522, 4
        %s534 = int_to_ptr.vmem [resolvable:$true] %s533
        %536 = dma.hbm_to_vmem [thread:$0]  %s532, 16, %s534, %s523
        %s537 = sadd.s32 %s287, 14
        %s538 = sld [smem:[#allocation5 + %s537]]
        %s539 = scalar_lea.hbm %s3, %s538
        %s540 = scalar_lea.vmem %s285, 14 [#allocation9]
        %s541 = scalar_lea.sflag [#allocation2], 14
        // Predicated region
        $region109: #{tpu_custom_call.1} parent=47 // pred_check
          _
        $region110: #{tpu_custom_call.1} parent=47 // pred_check_branch
          %543 = sbr.rel target = $region112
        $region111: #{tpu_custom_call.1} parent=47 // pred_region
          %544 = sst [smem:[#allocation12]] [#allocation41]
          %545 = sst [smem:[#allocation13]] [#allocation40]
        $region112: #{tpu_custom_call.1} parent=47 // pred_fallthru
          _
        %547 = shalt.err (0)
        %s549 = sshll.u32 %s539, 4
        %s550 = int_to_ptr.hbm [resolvable:$true] %s549
        %s551 = sshll.u32 %s540, 4
        %s552 = int_to_ptr.vmem [resolvable:$true] %s551
        %554 = dma.hbm_to_vmem [thread:$0]  %s550, 16, %s552, %s541
        %s555 = sadd.s32 %s287, 15
        %s556 = sld [smem:[#allocation5 + %s555]]
        %s557 = scalar_lea.hbm %s3, %s556
        %s558 = scalar_lea.vmem %s285, 15 [#allocation9]
        %s559 = scalar_lea.sflag [#allocation2], 15
        // Predicated region
        $region113: #{tpu_custom_call.1} parent=47 // pred_check
          _
        $region114: #{tpu_custom_call.1} parent=47 // pred_check_branch
          %561 = sbr.rel target = $region116
        $region115: #{tpu_custom_call.1} parent=47 // pred_region
          %562 = sst [smem:[#allocation12]] [#allocation43]
          %563 = sst [smem:[#allocation13]] [#allocation42]
        $region116: #{tpu_custom_call.1} parent=47 // pred_fallthru
          _
        %565 = shalt.err (0)
        %s567 = sshll.u32 %s557, 4
        %s568 = int_to_ptr.hbm [resolvable:$true] %s567
        %s569 = sshll.u32 %s558, 4
        %s570 = int_to_ptr.vmem [resolvable:$true] %s569
        %572 = dma.hbm_to_vmem [thread:$0]  %s568, 16, %s570, %s559
        %v573 = vld [vmem:[%s2] sm:$0x3]
        %v574 = vld [vmem:[%s4] sm:$0xff]
        %v575 = vld [vmem:[%s4 + $0x8] sm:$0xff]
        %v576 = vld [vmem:[%s4 + $0x10] sm:$0xff]
        %v577 = vld [vmem:[%s4 + $0x18] sm:$0xff]
        %v578 = vld [vmem:[%s4 + $0x20] sm:$0xff]
        %v579 = vld [vmem:[%s4 + $0x28] sm:$0xff]
        %v580 = vld [vmem:[%s4 + $0x30] sm:$0xff]
        %v581 = vld [vmem:[%s4 + $0x38] sm:$0xff]
        %v582 = vld [vmem:[%s5] sm:$0x1]
        %v584 = vperm.slane %v582, 0
        %vm586 = vcmask 523264
        %v588 = vsel %vm586, %v573, 0
        %590 = vmatpush.msra.mxu0 0.0
        %591 = vmatpush.msra.mxu0 0.0
        %592 = vmatpush.msra.mxu0 0.0
        %593 = vmatpush.msra.mxu0 0.0
        %594 = vmatpush.msra.mxu0 0.0
        %595 = vmatpush.msra.mxu0 0.0
        %596 = vmatpush.msra.mxu0 0.0
        %597 = vmatpush.msra.mxu0 0.0
        %598 = vmatpush.msra.mxu0 %v581
        %599 = vmatpush.msra.mxu0 %v580
        %600 = vmatpush.msra.mxu0 %v579
        %601 = vmatpush.msra.mxu0 %v578
        %602 = vmatpush.msra.mxu0 %v577
        %603 = vmatpush.msra.mxu0 %v576
        %604 = vmatpush.msra.mxu0 %v575
        %605 = vmatpush.msra.mxu0 %v574
        %606 = vmatmul.f32.gmra.mxu0 %v588
        %v607 = vpop.f32.mrf.mxu0
        %v608 = vadd.f32 %v584, %v607
        %609 = vdwg.mxu0
        %v610 = vtanh.pop %v608
        %v611 = vld [vmem:[%s6] sm:$0xff]
        %v612 = vld [vmem:[%s6 + $0x8] sm:$0xff]
        %v613 = vld [vmem:[%s6 + $0x10] sm:$0xff]
        %v614 = vld [vmem:[%s6 + $0x18] sm:$0xff]
        %v615 = vld [vmem:[%s7] sm:$0x1]
        %v617 = vperm.slane %v615, 0
        %vm619 = vcmask 261120
        %v621 = vsel %vm619, %v610, 0
        %623 = vmatpush.msra.mxu0 0.0
        %624 = vmatpush.msra.mxu0 0.0
        %625 = vmatpush.msra.mxu0 0.0
        %626 = vmatpush.msra.mxu0 0.0
        %627 = vmatpush.msra.mxu0 0.0
        %628 = vmatpush.msra.mxu0 0.0
        %629 = vmatpush.msra.mxu0 0.0
        %630 = vmatpush.msra.mxu0 0.0
        %631 = vmatpush.msra.mxu0 0.0
        %632 = vmatpush.msra.mxu0 0.0
        %633 = vmatpush.msra.mxu0 0.0
        %634 = vmatpush.msra.mxu0 0.0
        %635 = vmatpush.msra.mxu0 %v614
        %636 = vmatpush.msra.mxu0 %v613
        %637 = vmatpush.msra.mxu0 %v612
        %638 = vmatpush.msra.mxu0 %v611
        %639 = vmatmul.f32.gmra.mxu0 %v621
        %v640 = vpop.f32.mrf.mxu0
        %v641 = vadd.f32 %v617, %v640
        %642 = vdwg.mxu0
        %v643 = vtanh.pop %v641
        %v644 = vld [vmem:[#allocation6] sm:$0xff]
        %v645 = vld [vmem:[#allocation6 + $0x8] sm:$0xff]
        %v646 = vld [vmem:[#allocation6 + $0x10] sm:$0xff]
        %v647 = vld [vmem:[#allocation6 + $0x18] sm:$0xff]
        %v648 = vld [vmem:[#allocation6 + $0x20] sm:$0xff]
        %v649 = vld [vmem:[#allocation6 + $0x28] sm:$0xff]
        %v650 = vld [vmem:[#allocation6 + $0x30] sm:$0xff]
        %v651 = vld [vmem:[#allocation6 + $0x38] sm:$0xff]
        %v652 = vld [vmem:[#allocation6 + $0x40] sm:$0xff]
        %v653 = vld [vmem:[#allocation6 + $0x48] sm:$0xff]
        %v654 = vld [vmem:[#allocation6 + $0x50] sm:$0xff]
        %v655 = vld [vmem:[#allocation6 + $0x58] sm:$0xff]
        %v656 = vld [vmem:[#allocation6 + $0x60] sm:$0xff]
        %v657 = vld [vmem:[#allocation6 + $0x68] sm:$0xff]
        %v658 = vld [vmem:[#allocation6 + $0x70] sm:$0xff]
        %v659 = vld [vmem:[#allocation6 + $0x78] sm:$0xff]
        %v660 = vld [vmem:[%s9] sm:$0x3]
        %v662 = vperm.slane %v660, 0
        %v663 = vperm.slane %v660, 1
        %v667 = vsel %vm586, %v643, 0
        %669 = vmatpush.msra.mxu0 0.0
        %670 = vmatpush.msra.mxu0 0.0
        %671 = vmatpush.msra.mxu0 0.0
        %672 = vmatpush.msra.mxu0 0.0
        %673 = vmatpush.msra.mxu0 0.0
        %674 = vmatpush.msra.mxu0 0.0
        %675 = vmatpush.msra.mxu0 0.0
        %676 = vmatpush.msra.mxu0 0.0
        %677 = vmatpush.msra.mxu0 %v658
        %678 = vmatpush.msra.mxu0 %v656
        %679 = vmatpush.msra.mxu0 %v654
        %680 = vmatpush.msra.mxu0 %v652
        %681 = vmatpush.msra.mxu0 %v650
        %682 = vmatpush.msra.mxu0 %v648
        %683 = vmatpush.msra.mxu0 %v646
        %684 = vmatpush.msra.mxu0 %v644
        %685 = vmatmul.f32.gmra.mxu0 %v667
        %v686 = vpop.f32.mrf.mxu0
        %v687 = vadd.f32 %v662, %v686
        %688 = vdwg.mxu0
        %689 = vmatpush.msra.mxu0 0.0
        %690 = vmatpush.msra.mxu0 0.0
        %691 = vmatpush.msra.mxu0 0.0
        %692 = vmatpush.msra.mxu0 0.0
        %693 = vmatpush.msra.mxu0 0.0
        %694 = vmatpush.msra.mxu0 0.0
        %695 = vmatpush.msra.mxu0 0.0
        %696 = vmatpush.msra.mxu0 0.0
        %697 = vmatpush.msra.mxu0 %v659
        %698 = vmatpush.msra.mxu0 %v657
        %699 = vmatpush.msra.mxu0 %v655
        %700 = vmatpush.msra.mxu0 %v653
        %701 = vmatpush.msra.mxu0 %v651
        %702 = vmatpush.msra.mxu0 %v649
        %703 = vmatpush.msra.mxu0 %v647
        %704 = vmatpush.msra.mxu0 %v645
        %705 = vmatmul.f32.gmra.mxu0 %v667
        %v706 = vpop.f32.mrf.mxu0
        %v707 = vadd.f32 %v663, %v706
        %708 = vdwg.mxu0
        %s709 = smul.u32 1, 1
        %s710 = sshll.u32 %s709, 4
        %711 = dma.done [#allocation2], %s710
        %s712 = sshll.u32 %s709, 4
        %713 = dma.done %s307, %s712
        %s714 = sshll.u32 %s709, 4
        %715 = dma.done %s325, %s714
        %s716 = sshll.u32 %s709, 4
        %717 = dma.done %s343, %s716
        %s718 = sshll.u32 %s709, 4
        %719 = dma.done %s361, %s718
        %s720 = sshll.u32 %s709, 4
        %721 = dma.done %s379, %s720
        %s722 = sshll.u32 %s709, 4
        %723 = dma.done %s397, %s722
        %s724 = sshll.u32 %s709, 4
        %725 = dma.done %s415, %s724
        %s726 = sshll.u32 %s709, 4
        %727 = dma.done %s433, %s726
        %s728 = sshll.u32 %s709, 4
        %729 = dma.done %s451, %s728
        %s730 = sshll.u32 %s709, 4
        %731 = dma.done %s469, %s730
        %s732 = sshll.u32 %s709, 4
        %733 = dma.done %s487, %s732
        %s734 = sshll.u32 %s709, 4
        %735 = dma.done %s505, %s734
        %s736 = sshll.u32 %s709, 4
        %737 = dma.done %s523, %s736
        %s738 = sshll.u32 %s709, 4
        %739 = dma.done %s541, %s738
        %s740 = sshll.u32 %s709, 4
        %741 = dma.done %s559, %s740
        %s742 = sld [smem:[#allocation4]]
        %p743 = scmp.ge.s32.totalorder %s742, %s287
        %s744 = sadd.s32 %s287, 16
        %p745 = scmp.lt.s32.totalorder %s742, %s744
        %p746 = pnand %p743, %p745
        %p747 = pneg %p746
        // Predicated region
        $region117: #{tpu_custom_call.1} parent=47 // pred_check
          _
        $region118: #{tpu_custom_call.1} parent=47 // pred_check_branch
          %749 = sbr.rel (%p746) target = $region120
        $region119: #{tpu_custom_call.1} parent=47 // pred_region
          %s750 = ssub.s32 %s742, %s287
          %s751 = scalar_lea.vmem %s285, %s750 [#allocation9]
          %752 = vst [vmem:[%s751] sm:$0x1] %v687
        $region120: #{tpu_custom_call.1} parent=47 // pred_fallthru
          _
        %s753 = sadd.s32 %s742, 1
        %p754 = scmp.ge.s32.totalorder %s753, %s287
        %p755 = scmp.lt.s32.totalorder %s753, %s744
        %p756 = pnand %p754, %p755
        %p757 = pneg %p756
        // Predicated region
        $region121: #{tpu_custom_call.1} parent=47 // pred_check
          _
        $region122: #{tpu_custom_call.1} parent=47 // pred_check_branch
          %759 = sbr.rel (%p756) target = $region124
        $region123: #{tpu_custom_call.1} parent=47 // pred_region
          %s760 = ssub.s32 %s753, %s287
          %s761 = scalar_lea.vmem %s285, %s760 [#allocation9]
          %762 = vst [vmem:[%s761] sm:$0x1] %v707
        $region124: #{tpu_custom_call.1} parent=47 // pred_fallthru
          _
        %s763 = sadd.s32 %s742, 16
        %p764 = scmp.ge.s32.totalorder %s763, %s287
        %p765 = scmp.lt.s32.totalorder %s763, %s744
        %p766 = pnand %p764, %p765
        %p767 = pneg %p766
        // Predicated region
        $region125: #{tpu_custom_call.1} parent=47 // pred_check
          _
        $region126: #{tpu_custom_call.1} parent=47 // pred_check_branch
          %769 = sbr.rel (%p766) target = $region128
        $region127: #{tpu_custom_call.1} parent=47 // pred_region
          %s770 = ssub.s32 %s763, %s287
          %s771 = scalar_lea.vmem %s285, %s770 [#allocation9]
          %772 = vst [vmem:[%s771 - $0x1] sm:$0x2] %v687
        $region128: #{tpu_custom_call.1} parent=47 // pred_fallthru
          _
        %s773 = sadd.s32 %s742, 17
        %p774 = scmp.ge.s32.totalorder %s773, %s287
        %p775 = scmp.lt.s32.totalorder %s773, %s744
        %p776 = pnand %p774, %p775
        %p777 = pneg %p776
        // Predicated region
        $region129: #{tpu_custom_call.1} parent=47 // pred_check
          _
        $region130: #{tpu_custom_call.1} parent=47 // pred_check_branch
          %779 = sbr.rel (%p776) target = $region132
        $region131: #{tpu_custom_call.1} parent=47 // pred_region
          %s780 = ssub.s32 %s773, %s287
          %s781 = scalar_lea.vmem %s285, %s780 [#allocation9]
          %782 = vst [vmem:[%s781 - $0x1] sm:$0x2] %v707
        $region132: #{tpu_custom_call.1} parent=47 // pred_fallthru
          _
        %s783 = sand.u32 %s189, 1
        %s784 = scalar_lea.sflag [#allocation8], %s783
        %s785 = sand.u32 %s189, 1
        %s786 = smul.addr %s785, 16
        %s787 = scalar_lea.vmem [#allocation9], %s786
        // Predicated region
        $region133: #{tpu_custom_call.1} parent=47 // pred_check
          %p788 = pneg %p199
        $region134: #{tpu_custom_call.1} parent=47 // pred_check_branch
          %790 = sbr.rel (%p788) target = $region136
        $region135: #{tpu_custom_call.1} parent=47 // pred_region
          %s791 = smul.u32 2, %s34
          %793 = vsyncadd %s784, 0
          %s794 = smul.addr %s791, 8
          %s795 = scalar_lea.hbm %s10, %s794
          %s796 = sshll.u32 %s787, 4
          %s797 = int_to_ptr.vmem [resolvable:$true] %s796
          %s798 = sshll.u32 %s795, 4
          %s799 = int_to_ptr.hbm [resolvable:$true] %s798
          %804 = dma.vmem_to_hbm [thread:$0]  %s797, 256, %s799, %s784, 128, 128, 8
        $region136: #{tpu_custom_call.1} parent=47 // pred_fallthru
          _
      $region48: #{tpu_custom_call.1} parent=5 // pred_fallthru
        _
      %p805 = scmp.le.s32.totalorder 2, %s29
      // Predicated region
      $region137: #{tpu_custom_call.1} parent=5 // pred_check
        %p806 = pneg %p805
      $region138: #{tpu_custom_call.1} parent=5 // pred_check_branch
        %808 = sbr.rel (%p806) target = $region140
      $region139: #{tpu_custom_call.1} parent=5 // pred_region
        %s809 = ssub.s32 %s29, 2
        // Predicated region
        $region141: #{tpu_custom_call.1} parent=139 // pred_check
          %p810 = pneg %p205
        $region142: #{tpu_custom_call.1} parent=139 // pred_check_branch
          %812 = sbr.rel (%p810) target = $region144
        $region143: #{tpu_custom_call.1} parent=139 // pred_region
          %s813 = sand.u32 %s190, 1
          %s814 = scalar_lea.sflag [#allocation8], %s813
          %s815 = sand.u32 %s190, 1
          %s816 = smul.addr %s815, 16
          %s817 = scalar_lea.vmem [#allocation9], %s816
          %819 = dma.done %s814, 256
        $region144: #{tpu_custom_call.1} parent=139 // pred_fallthru
          _
      $region140: #{tpu_custom_call.1} parent=5 // pred_fallthru
        _
    $region6: #{tpu_custom_call.1} parent=1 // loop_footer
      %s33 = sadd.s32 1, %s29
    $region7: #{tpu_custom_call.1} parent=1 // loop_footer_branch
      %28 = sbr.rel target = $region3
    $region8: #{tpu_custom_call.1} parent=1 // loop_exit
      _
    %820 = vsyncpa [#allocation7], 1
    %s821 = scalar_lea.sflag [#allocation7], 1
    %822 = vsyncpa %s821, 1
    %823 = vsyncpa [#allocation8], 1
    %s824 = scalar_lea.sflag [#allocation8], 1
    %825 = vsyncpa %s824, 1
  %826 = vsyncmov [#allocation2]
  %s827 = vpop.sfrf %826
  %p828 = scmp.eq.s32.totalorder %s827, 0
  %p829 = pneg %p828
  %831 = shalt.err (%p829)
  %s832 = scalar_lea.sflag [#allocation2], 1
  %833 = vsyncmov %s832
  %s834 = vpop.sfrf %833
  %p835 = scmp.eq.s32.totalorder %s834, 0
  %p836 = pneg %p835
  %838 = shalt.err (%p836)
  %s839 = scalar_lea.sflag [#allocation2], 2
  %840 = vsyncmov %s839
  %s841 = vpop.sfrf %840
  %p842 = scmp.eq.s32.totalorder %s841, 0
  %p843 = pneg %p842
  %845 = shalt.err (%p843)
  %s846 = scalar_lea.sflag [#allocation2], 3
  %847 = vsyncmov %s846
  %s848 = vpop.sfrf %847
  %p849 = scmp.eq.s32.totalorder %s848, 0
  %p850 = pneg %p849
  %852 = shalt.err (%p850)
  %s853 = scalar_lea.sflag [#allocation2], 4
  %854 = vsyncmov %s853
  %s855 = vpop.sfrf %854
  %p856 = scmp.eq.s32.totalorder %s855, 0
  %p857 = pneg %p856
  %859 = shalt.err (%p857)
  %s860 = scalar_lea.sflag [#allocation2], 5
  %861 = vsyncmov %s860
  %s862 = vpop.sfrf %861
  %p863 = scmp.eq.s32.totalorder %s862, 0
  %p864 = pneg %p863
  %866 = shalt.err (%p864)
  %s867 = scalar_lea.sflag [#allocation2], 6
  %868 = vsyncmov %s867
  %s869 = vpop.sfrf %868
  %p870 = scmp.eq.s32.totalorder %s869, 0
  %p871 = pneg %p870
  %873 = shalt.err (%p871)
  %s874 = scalar_lea.sflag [#allocation2], 7
  %875 = vsyncmov %s874
  %s876 = vpop.sfrf %875
  %p877 = scmp.eq.s32.totalorder %s876, 0
  %p878 = pneg %p877
  %880 = shalt.err (%p878)
  %s881 = scalar_lea.sflag [#allocation2], 8
  %882 = vsyncmov %s881
  %s883 = vpop.sfrf %882
  %p884 = scmp.eq.s32.totalorder %s883, 0
  %p885 = pneg %p884
  %887 = shalt.err (%p885)
  %s888 = scalar_lea.sflag [#allocation2], 9
  %889 = vsyncmov %s888
  %s890 = vpop.sfrf %889
  %p891 = scmp.eq.s32.totalorder %s890, 0
  %p892 = pneg %p891
  %894 = shalt.err (%p892)
  %s895 = scalar_lea.sflag [#allocation2], 10
  %896 = vsyncmov %s895
  %s897 = vpop.sfrf %896
  %p898 = scmp.eq.s32.totalorder %s897, 0
  %p899 = pneg %p898
  %901 = shalt.err (%p899)
  %s902 = scalar_lea.sflag [#allocation2], 11
  %903 = vsyncmov %s902
  %s904 = vpop.sfrf %903
  %p905 = scmp.eq.s32.totalorder %s904, 0
  %p906 = pneg %p905
  %908 = shalt.err (%p906)
  %s909 = scalar_lea.sflag [#allocation2], 12
  %910 = vsyncmov %s909
  %s911 = vpop.sfrf %910
  %p912 = scmp.eq.s32.totalorder %s911, 0
  %p913 = pneg %p912
  %915 = shalt.err (%p913)
  %s916 = scalar_lea.sflag [#allocation2], 13
  %917 = vsyncmov %s916
  %s918 = vpop.sfrf %917
  %p919 = scmp.eq.s32.totalorder %s918, 0
  %p920 = pneg %p919
  %922 = shalt.err (%p920)
  %s923 = scalar_lea.sflag [#allocation2], 14
  %924 = vsyncmov %s923
  %s925 = vpop.sfrf %924
  %p926 = scmp.eq.s32.totalorder %s925, 0
  %p927 = pneg %p926
  %929 = shalt.err (%p927)
  %s930 = scalar_lea.sflag [#allocation2], 15
  %931 = vsyncmov %s930
  %s932 = vpop.sfrf %931
  %p933 = scmp.eq.s32.totalorder %s932, 0
  %p934 = pneg %p933
  %936 = shalt.err (%p934)

</llo_original>
